<compile_context>
chip_gen: v7x
topology: tpu7x:2x2x1
jax: 0.10.0
libtpu: 0.0.40
codegen_flags: <defaults>
</compile_context>

<pallas_src>
import functools
import math

import jax
import jax.numpy as jnp
import numpy as np
from jax import lax
from jax.experimental import pallas as pl
from jax.experimental.pallas import tpu as pltpu


def _gelu_exact(x):
    # torch.nn.functional.gelu default (erf-based, non-approximate).
    return 0.5 * x * (1.0 + lax.erf(x * (1.0 / math.sqrt(2.0))))


def maphead_kernel(x_ref, qt_ref, hexp_ref, wkv_ref, bkv_ref, wo_ref, bo_ref,
                   g_ref, beta_ref, w1_ref, b1_ref, w2_ref, b2_ref, o_ref,
                   *, tb, seq_len, num_heads, num_readouts, use_tanh, max_action):
    TB, L, H, R = tb, seq_len, num_heads, num_readouts
    D = x_ref.shape[1]

    # x block is a dense (TB*L, D) slab; cast to bf16 for the MXU, accumulate in f32.
    x = x_ref[...].astype(jnp.bfloat16)

    # Fused K/V projection: one MXU matmul with 2D output columns, f32 accumulation.
    kv = jnp.dot(x, wkv_ref[...], preferred_element_type=jnp.float32) + bkv_ref[...]
    k = kv[:, :D]
    v = kv[:, D:]

    # All-head / all-readout attention scores in one MXU push:
    #   s[b*L+l, r*H+h] = <q_{r} restricted to head-h lanes, k[b, l]> / sqrt(hd)
    s = jnp.dot(k.astype(jnp.bfloat16), qt_ref[...],
                preferred_element_type=jnp.float32)              # (TB*L, R*H)
    s3 = s.reshape(TB, L, R * H)
    m = jnp.max(s3, axis=1, keepdims=True)                       # per (batch, readout*head)
    e = jnp.exp(s3 - m)
    a3 = e / jnp.sum(e, axis=1, keepdims=True)                   # exact softmax (f32)

    hexp = hexp_ref[...]                                         # (H, D) one-hot, bf16
    rows = []
    for r in range(R):                                           # static; R is typically 1
        a_r = (a3 if R == 1 else a3[:, :, r * H:(r + 1) * H]).reshape(TB * L, H)
        # Expand per-head weights onto that head's feature lanes, weight V, and reduce
        # over the L keys of each batch element (sublane reduce over L).
        a_exp = jnp.dot(a_r.astype(jnp.bfloat16), hexp,
                        preferred_element_type=jnp.float32)      # (TB*L, D)
        rows.append(jnp.sum((a_exp * v).reshape(TB, L, D), axis=1))   # (TB, D)
    attn = rows[0] if R == 1 else jnp.stack(rows, axis=1).reshape(TB * R, D)

    # MHA output projection.
    attn_out = jnp.dot(attn.astype(jnp.bfloat16), wo_ref[...],
                       preferred_element_type=jnp.float32) + bo_ref[...]

    # LayerNorm (eps=1e-5, biased variance -- matches torch.nn.LayerNorm), f32.
    mu = jnp.mean(attn_out, axis=-1, keepdims=True)
    var = jnp.mean((attn_out - mu) ** 2, axis=-1, keepdims=True)
    y = (attn_out - mu) * lax.rsqrt(var + 1e-5) * g_ref[...] + beta_ref[...]

    # MlpBlock: fc2(gelu(fc1(y))), residual add.
    h1 = jnp.dot(y.astype(jnp.bfloat16), w1_ref[...],
                 preferred_element_type=jnp.float32) + b1_ref[...]
    h1 = _gelu_exact(h1)
    mlp = jnp.dot(h1.astype(jnp.bfloat16), w2_ref[...],
                  preferred_element_type=jnp.float32) + b2_ref[...]

    out = attn_out + mlp
    if use_tanh:
        out = jnp.tanh(out * (1.0 / max_action)) * max_action
    o_ref[...] = out.astype(o_ref.dtype)


def _vmem_bytes_estimate(TB, L, R, H, D, mlp_dim, x_itemsize):
    """Rough per-step VMEM working-set estimate (bytes)."""
    bf16, f32 = 2, 4
    weights = (bf16 * (D * 2 * D + D * R * H + H * D + D * D + 2 * D * mlp_dim)
               + f32 * (2 * D + 4 * D + mlp_dim))                 # biases + LN params
    io = 2 * x_itemsize * TB * L * D + 2 * x_itemsize * TB * R * D  # double-buffered x/out
    tmp = (f32 * TB * L * (10 * D + 4 * R * H)                    # kv, casts, a_exp, products
           + f32 * TB * R * (4 * D + 3 * mlp_dim))                # attn_out, y, h1, mlp
    return int(weights + io + tmp)


def map_head_forward(x, params, *, num_heads=8, use_tanh=False, max_action=5.0):
    B, L, D = x.shape
    R = params["p"].shape[1]
    H = num_heads
    assert D % H == 0, "embed_dim must be divisible by num_heads"
    hd = D // H
    mlp_dim = params["w1"].shape[1]

    # ---- Batch-invariant precompute (hoisted out of the kernel) ------------------
    # q = p @ Wq + bq, with the 1/sqrt(hd) attention scale folded in; head-masked so a
    # single k @ qhat matmul yields all R*H per-head scores.
    q = (params["p"].reshape(R, D) @ params["wq"]
         + params["bq"].reshape(1, D)) * (1.0 / math.sqrt(hd))            # (R, D)
    head_of_lane = jnp.arange(D, dtype=jnp.int32) // hd
    hexp = (head_of_lane[None, :] == jnp.arange(H, dtype=jnp.int32)[:, None]
            ).astype(jnp.float32)                                         # (H, D) one-hot
    qhat_t = (q[:, None, :] * hexp[None, :, :]).reshape(R * H, D).T       # (D, R*H)

    # bf16 MXU weight operands; biases / LN params stay f32 (added post-accumulation).
    qhat_t = qhat_t.astype(jnp.bfloat16)
    hexp_b = hexp.astype(jnp.bfloat16)
    wkv = jnp.concatenate([params["wk"], params["wv"]], axis=1).astype(jnp.bfloat16)  # (D, 2D)
    bkv = jnp.concatenate([params["bk"], params["bv"]], axis=1)                       # (1, 2D) f32
    wo = params["wo"].astype(jnp.bfloat16)
    w1 = params["w1"].astype(jnp.bfloat16)
    w2 = params["w2"].astype(jnp.bfloat16)

    # Flatten x once in XLA so the kernel block is an already lane/sublane-dense slab.
    x2 = x.reshape(B * L, D)

    # ---- Batch blocking -----------------------------------------------------------
    TB = max(1, 512 // max(L, 1))        # target ~512 K/V rows per grid step
    TB = min(TB, B)
    if B >= 2:
        TB = min(TB, pl.cdiv(B, 2))      # keep >=2 grid steps so both v7x TCs get work
    while TB > 1 and _vmem_bytes_estimate(TB, L, R, H, D, mlp_dim,
                                          x.dtype.itemsize) > 48 * 2**20:
        TB = max(1, TB // 2)             # shrink block if the working set is too large
    if pl.cdiv(B, TB) > 1:
        # Multi-block 2-D specs need their second-minor (sublane) block dim % 8 == 0;
        # if not achievable below B, TB reaches B and the single full block is always legal.
        while TB < B and ((TB * L) % 8 != 0 or (TB * R) % 8 != 0):
            TB += 1
    grid = (pl.cdiv(B, TB),)
    # If TB does not divide B, the tail block reads padded rows and its out-of-range
    # output rows are dropped on write; every row's computation is independent, so this
    # is safe (no cross-batch reductions exist in this kernel).

    vmem_limit = int(min(max(32 * 2**20,
                             2 * _vmem_bytes_estimate(TB, L, R, H, D, mlp_dim,
                                                      x.dtype.itemsize)),
                         96 * 2**20))

    kernel = functools.partial(maphead_kernel, tb=TB, seq_len=L, num_heads=H,
                               num_readouts=R, use_tanh=use_tanh, max_action=max_action)

    cost = pl.CostEstimate(
        flops=int(2 * B * L * D * 2 * D          # fused K/V projection
                  + 2 * B * L * D * R * H        # scores
                  + 2 * B * L * R * H * D        # head expansion of attention weights
                  + 2 * B * R * D * D            # output projection
                  + 4 * B * R * D * mlp_dim),    # fc1 + fc2
        transcendentals=int(B * L * R * H + B * R * mlp_dim + B * R),
        bytes_accessed=int(x2.size * x2.dtype.itemsize + B * R * D * x.dtype.itemsize
                           + 2 * (2 * D * D + D * D + 2 * D * mlp_dim + D * R * H + H * D)))

    operands = (x2, qhat_t, hexp_b, wkv, bkv, wo, params["bo"],
                params["ln_g"], params["ln_b"], w1, params["b1"], w2, params["b2"])

    def run(single_buffer_consts):
        def const_spec(shape):
            idx = lambda b: (0, 0)
            if single_buffer_consts:
                # Constant-index parameter blocks: single-buffer them (they never change
                # across grid steps) to halve resident weight VMEM.
                return pl.BlockSpec(shape, idx, pipeline_mode=pl.Buffered(1))
            return pl.BlockSpec(shape, idx)

        in_specs = [
            pl.BlockSpec((TB * L, D), lambda b: (b, 0)),     # x, TB batch elements / step
            const_spec((D, R * H)),                          # qhat_t (scaled, head-masked q)
            const_spec((H, D)),                              # head-expansion one-hot
            const_spec((D, 2 * D)), const_spec((1, 2 * D)),  # fused wkv, bkv
            const_spec((D, D)), const_spec((1, D)),          # wo, bo
            const_spec((1, D)), const_spec((1, D)),          # layernorm gamma, beta
            const_spec((D, mlp_dim)), const_spec((1, mlp_dim)),   # fc1 weight, bias
            const_spec((mlp_dim, D)), const_spec((1, D)),    # fc2 weight, bias
        ]
        return pl.pallas_call(
            kernel,
            out_shape=jax.ShapeDtypeStruct((B * R, D), x.dtype),
            grid=grid,
            in_specs=in_specs,
            out_specs=pl.BlockSpec((TB * R, D), lambda b: (b, 0)),
            compiler_params=pltpu.CompilerParams(
                dimension_semantics=("parallel",),
                vmem_limit_bytes=vmem_limit),
            cost_estimate=cost,
        )(*operands)

    try:
        out_flat = run(True)
    except Exception:
        # pipeline_mode=pl.Buffered(1) not supported on this jax/libtpu build:
        # fall back to default double-buffered constant blocks.
        out_flat = run(False)

    return out_flat.reshape(B, R, D)


def ref_forward(x, params, num_heads=8):
    """Pure-JAX f32 reference of MAPHead.forward (mask=None, use_tanh=False)."""
    B, L, D = x.shape
    R = params["p"].shape[1]
    hd = D // num_heads
    p = jnp.broadcast_to(params["p"], (B, R, D))
    q = p @ params["wq"] + params["bq"]
    k = x @ params["wk"] + params["bk"]
    v = x @ params["wv"] + params["bv"]
    qh = q.reshape(B, R, num_heads, hd).transpose(0, 2, 1, 3)
    kh = k.reshape(B, L, num_heads, hd).transpose(0, 2, 1, 3)
    vh = v.reshape(B, L, num_heads, hd).transpose(0, 2, 1, 3)
    s = jnp.einsum("bhrd,bhld->bhrl", qh, kh) / math.sqrt(hd)
    a = jax.nn.softmax(s, axis=-1)
    o = jnp.einsum("bhrl,bhld->bhrd", a, vh).transpose(0, 2, 1, 3).reshape(B, R, D)
    attn_out = o @ params["wo"] + params["bo"]
    mu = jnp.mean(attn_out, axis=-1, keepdims=True)
    var = jnp.mean((attn_out - mu) ** 2, axis=-1, keepdims=True)
    y = (attn_out - mu) / jnp.sqrt(var + 1e-5) * params["ln_g"] + params["ln_b"]
    h1 = y @ params["w1"] + params["b1"]
    h1 = 0.5 * h1 * (1.0 + lax.erf(h1 / jnp.sqrt(2.0)))
    m = h1 @ params["w2"] + params["b2"]
    return attn_out + m


if __name__ == "__main__":
    # Small shapes consistent with MAPHead(input_dim=32, num_heads=8, num_readouts=1)
    B, L, D = 2, 8, 32
    H, R = 8, 1
    mlp_dim = 4 * D

    key = jax.random.PRNGKey(0)
    ks = jax.random.split(key, 16)

    def w(k, shape, scale=0.05):
        return (scale * jax.random.normal(k, shape)).astype(jnp.float32)

    bound = math.sqrt(6.0 / (R + D))  # xavier_uniform for the probe tokens p
    params = {
        "p":   jax.random.uniform(ks[0], (1, R, D), jnp.float32, -bound, bound),
        "wq":  w(ks[1], (D, D)),  "wk": w(ks[2], (D, D)),  "wv": w(ks[3], (D, D)),
        "bq":  w(ks[4], (1, D)),  "bk": w(ks[5], (1, D)),  "bv": w(ks[6], (1, D)),
        "wo":  w(ks[7], (D, D)),  "bo": w(ks[8], (1, D)),
        "ln_g": jnp.ones((1, D), jnp.float32),
        "ln_b": jnp.zeros((1, D), jnp.float32),
        "w1":  w(ks[9],  (D, mlp_dim)), "b1": w(ks[10], (1, mlp_dim)),
        "w2":  w(ks[11], (mlp_dim, D)), "b2": w(ks[12], (1, D)),
    }
    x = jax.random.normal(ks[13], (B, L, D), jnp.float32)

    out = map_head_forward(x, params, num_heads=H)
    out = jax.block_until_ready(out)

    ref = ref_forward(x, params, num_heads=H)
    # bf16 MXU inputs (f32 accumulation) => tolerance loosened vs the pure-f32 reference.
    np.testing.assert_allclose(np.asarray(out), np.asarray(ref), rtol=2e-2, atol=2e-2)

    print("KERNEL_OK")
</pallas_src>

<mosaic_0001>
module attributes {stable_mosaic.version = 11 : i64} {
  func.func @maphead_kernel(%arg0: i32, %arg1: memref<16x32xf32, #tpu.memory_space<vmem>>, %arg2: memref<32x8xbf16, #tpu.memory_space<vmem>>, %arg3: memref<8x32xbf16, #tpu.memory_space<vmem>>, %arg4: memref<32x64xbf16, #tpu.memory_space<vmem>>, %arg5: memref<1x64xf32, #tpu.memory_space<vmem>>, %arg6: memref<32x32xbf16, #tpu.memory_space<vmem>>, %arg7: memref<1x32xf32, #tpu.memory_space<vmem>>, %arg8: memref<1x32xf32, #tpu.memory_space<vmem>>, %arg9: memref<1x32xf32, #tpu.memory_space<vmem>>, %arg10: memref<32x128xbf16, #tpu.memory_space<vmem>>, %arg11: memref<1x128xf32, #tpu.memory_space<vmem>>, %arg12: memref<128x32xbf16, #tpu.memory_space<vmem>>, %arg13: memref<1x32xf32, #tpu.memory_space<vmem>>, %arg14: memref<2x32xf32, #tpu.memory_space<vmem>>) attributes {dimension_semantics = [#tpu.dimension_semantics<parallel>], iteration_bounds = array<i64: 1>, scalar_prefetch = 0 : i64, scratch_operands = 0 : i64, tpu.core_type = #tpu.core_type<tc>, window_params = [{transform_indices = @transform_0, window_bounds = array<i64: 16, 32>}, {pipeline_mode = #tpu.pipeline_mode<synchronous>, transform_indices = @transform_1, window_bounds = array<i64: 32, 8>}, {pipeline_mode = #tpu.pipeline_mode<synchronous>, transform_indices = @transform_2, window_bounds = array<i64: 8, 32>}, {pipeline_mode = #tpu.pipeline_mode<synchronous>, transform_indices = @transform_3, window_bounds = array<i64: 32, 64>}, {pipeline_mode = #tpu.pipeline_mode<synchronous>, transform_indices = @transform_4, window_bounds = array<i64: 1, 64>}, {pipeline_mode = #tpu.pipeline_mode<synchronous>, transform_indices = @transform_5, window_bounds = array<i64: 32, 32>}, {pipeline_mode = #tpu.pipeline_mode<synchronous>, transform_indices = @transform_6, window_bounds = array<i64: 1, 32>}, {pipeline_mode = #tpu.pipeline_mode<synchronous>, transform_indices = @transform_7, window_bounds = array<i64: 1, 32>}, {pipeline_mode = #tpu.pipeline_mode<synchronous>, transform_indices = @transform_8, window_bounds = array<i64: 1, 32>}, {pipeline_mode = #tpu.pipeline_mode<synchronous>, transform_indices = @transform_9, window_bounds = array<i64: 32, 128>}, {pipeline_mode = #tpu.pipeline_mode<synchronous>, transform_indices = @transform_10, window_bounds = array<i64: 1, 128>}, {pipeline_mode = #tpu.pipeline_mode<synchronous>, transform_indices = @transform_11, window_bounds = array<i64: 128, 32>}, {pipeline_mode = #tpu.pipeline_mode<synchronous>, transform_indices = @transform_12, window_bounds = array<i64: 1, 32>}, {transform_indices = @transform_13, window_bounds = array<i64: 2, 32>}]} {
    %c0 = arith.constant 0 : index
    %c0_0 = arith.constant 0 : index
    %0 = vector.load %arg1[%c0, %c0_0] : memref<16x32xf32, #tpu.memory_space<vmem>>, vector<16x32xf32>
    %1 = arith.truncf %0 : vector<16x32xf32> to vector<16x32xbf16>
    %c0_1 = arith.constant 0 : index
    %c0_2 = arith.constant 0 : index
    %2 = vector.load %arg4[%c0_1, %c0_2] : memref<32x64xbf16, #tpu.memory_space<vmem>>, vector<32x64xbf16>
    %cst = arith.constant dense<0.000000e+00> : vector<16x64xf32>
    %3 = tpu.matmul %1, %2, %cst {dimension_numbers = #tpu.dot_dimension_numbers<[1], [0], [0], [1], [0, 0, 1, 1], [], []>} : vector<16x32xbf16>, vector<32x64xbf16>, vector<16x64xf32> -> vector<16x64xf32>
    %c0_3 = arith.constant 0 : index
    %c0_4 = arith.constant 0 : index
    %4 = vector.load %arg5[%c0_3, %c0_4] : memref<1x64xf32, #tpu.memory_space<vmem>>, vector<1x64xf32>
    %5 = vector.broadcast %4 : vector<1x64xf32> to vector<16x64xf32>
    %6 = arith.addf %3, %5 : vector<16x64xf32>
    %7 = vector.extract_strided_slice %6 {offsets = [0, 0], sizes = [16, 32], strides = [1, 1]} : vector<16x64xf32> to vector<16x32xf32>
    %8 = vector.extract_strided_slice %6 {offsets = [0, 32], sizes = [16, 32], strides = [1, 1]} : vector<16x64xf32> to vector<16x32xf32>
    %9 = arith.truncf %7 : vector<16x32xf32> to vector<16x32xbf16>
    %c0_5 = arith.constant 0 : index
    %c0_6 = arith.constant 0 : index
    %10 = vector.load %arg2[%c0_5, %c0_6] : memref<32x8xbf16, #tpu.memory_space<vmem>>, vector<32x8xbf16>
    %cst_7 = arith.constant dense<0.000000e+00> : vector<16x8xf32>
    %11 = tpu.matmul %9, %10, %cst_7 {dimension_numbers = #tpu.dot_dimension_numbers<[1], [0], [0], [1], [0, 0, 1, 1], [], []>} : vector<16x32xbf16>, vector<32x8xbf16>, vector<16x8xf32> -> vector<16x8xf32>
    %12 = vector.shape_cast %11 : vector<16x8xf32> to vector<2x8x8xf32>
    %cst_8 = arith.constant dense<0xFF800000> : vector<2x8xf32>
    %13 = vector.multi_reduction <maximumf>, %12, %cst_8 [1] : vector<2x8x8xf32> to vector<2x8xf32>
    %14 = vector.shape_cast %13 : vector<2x8xf32> to vector<2x1x8xf32>
    %15 = vector.broadcast %14 : vector<2x1x8xf32> to vector<2x8x8xf32>
    %16 = arith.subf %12, %15 : vector<2x8x8xf32>
    %17 = math.exp %16 : vector<2x8x8xf32>
    %cst_9 = arith.constant dense<0.000000e+00> : vector<2x8xf32>
    %18 = vector.multi_reduction <add>, %17, %cst_9 [1] : vector<2x8x8xf32> to vector<2x8xf32>
    %19 = vector.shape_cast %18 : vector<2x8xf32> to vector<2x1x8xf32>
    %20 = vector.broadcast %19 : vector<2x1x8xf32> to vector<2x8x8xf32>
    %21 = arith.divf %17, %20 : vector<2x8x8xf32>
    %c0_10 = arith.constant 0 : index
    %c0_11 = arith.constant 0 : index
    %22 = vector.load %arg3[%c0_10, %c0_11] : memref<8x32xbf16, #tpu.memory_space<vmem>>, vector<8x32xbf16>
    %23 = vector.shape_cast %21 : vector<2x8x8xf32> to vector<16x8xf32>
    %24 = arith.truncf %23 : vector<16x8xf32> to vector<16x8xbf16>
    %cst_12 = arith.constant dense<0.000000e+00> : vector<16x32xf32>
    %25 = tpu.matmul %24, %22, %cst_12 {dimension_numbers = #tpu.dot_dimension_numbers<[1], [0], [0], [1], [0, 0, 1, 1], [], []>} : vector<16x8xbf16>, vector<8x32xbf16>, vector<16x32xf32> -> vector<16x32xf32>
    %26 = arith.mulf %25, %8 : vector<16x32xf32>
    %27 = vector.shape_cast %26 : vector<16x32xf32> to vector<2x8x32xf32>
    %cst_13 = arith.constant dense<0.000000e+00> : vector<2x32xf32>
    %28 = vector.multi_reduction <add>, %27, %cst_13 [1] : vector<2x8x32xf32> to vector<2x32xf32>
    %29 = arith.truncf %28 : vector<2x32xf32> to vector<2x32xbf16>
    %c0_14 = arith.constant 0 : index
    %c0_15 = arith.constant 0 : index
    %30 = vector.load %arg6[%c0_14, %c0_15] : memref<32x32xbf16, #tpu.memory_space<vmem>>, vector<32x32xbf16>
    %cst_16 = arith.constant dense<0.000000e+00> : vector<2x32xf32>
    %31 = tpu.matmul %29, %30, %cst_16 {dimension_numbers = #tpu.dot_dimension_numbers<[1], [0], [0], [1], [0, 0, 1, 1], [], []>} : vector<2x32xbf16>, vector<32x32xbf16>, vector<2x32xf32> -> vector<2x32xf32>
    %c0_17 = arith.constant 0 : index
    %c0_18 = arith.constant 0 : index
    %32 = vector.load %arg7[%c0_17, %c0_18] : memref<1x32xf32, #tpu.memory_space<vmem>>, vector<1x32xf32>
    %33 = vector.broadcast %32 : vector<1x32xf32> to vector<2x32xf32>
    %34 = arith.addf %31, %33 : vector<2x32xf32>
    %cst_19 = arith.constant dense<0.000000e+00> : vector<2xf32>
    %35 = vector.multi_reduction <add>, %34, %cst_19 [1] : vector<2x32xf32> to vector<2xf32>
    %36 = vector.shape_cast %35 : vector<2xf32> to vector<2x1xf32>
    %cst_20 = arith.constant 3.200000e+01 : f32
    %37 = vector.broadcast %cst_20 : f32 to vector<2x1xf32>
    %38 = arith.divf %36, %37 : vector<2x1xf32>
    %39 = vector.broadcast %38 : vector<2x1xf32> to vector<2x32xf32>
    %40 = arith.subf %34, %39 : vector<2x32xf32>
    %41 = arith.mulf %40, %40 : vector<2x32xf32>
    %cst_21 = arith.constant dense<0.000000e+00> : vector<2xf32>
    %42 = vector.multi_reduction <add>, %41, %cst_21 [1] : vector<2x32xf32> to vector<2xf32>
    %43 = vector.shape_cast %42 : vector<2xf32> to vector<2x1xf32>
    %cst_22 = arith.constant 3.200000e+01 : f32
    %44 = vector.broadcast %cst_22 : f32 to vector<2x1xf32>
    %45 = arith.divf %43, %44 : vector<2x1xf32>
    %46 = vector.broadcast %38 : vector<2x1xf32> to vector<2x32xf32>
    %47 = arith.subf %34, %46 : vector<2x32xf32>
    %cst_23 = arith.constant 9.99999974E-6 : f32
    %48 = vector.broadcast %cst_23 : f32 to vector<2x1xf32>
    %49 = arith.addf %45, %48 : vector<2x1xf32>
    %50 = math.rsqrt %49 : vector<2x1xf32>
    %51 = vector.broadcast %50 : vector<2x1xf32> to vector<2x32xf32>
    %52 = arith.mulf %47, %51 : vector<2x32xf32>
    %c0_24 = arith.constant 0 : index
    %c0_25 = arith.constant 0 : index
    %53 = vector.load %arg8[%c0_24, %c0_25] : memref<1x32xf32, #tpu.memory_space<vmem>>, vector<1x32xf32>
    %54 = vector.broadcast %53 : vector<1x32xf32> to vector<2x32xf32>
    %55 = arith.mulf %52, %54 : vector<2x32xf32>
    %c0_26 = arith.constant 0 : index
    %c0_27 = arith.constant 0 : index
    %56 = vector.load %arg9[%c0_26, %c0_27] : memref<1x32xf32, #tpu.memory_space<vmem>>, vector<1x32xf32>
    %57 = vector.broadcast %56 : vector<1x32xf32> to vector<2x32xf32>
    %58 = arith.addf %55, %57 : vector<2x32xf32>
    %59 = arith.truncf %58 : vector<2x32xf32> to vector<2x32xbf16>
    %c0_28 = arith.constant 0 : index
    %c0_29 = arith.constant 0 : index
    %60 = vector.load %arg10[%c0_28, %c0_29] : memref<32x128xbf16, #tpu.memory_space<vmem>>, vector<32x128xbf16>
    %cst_30 = arith.constant dense<0.000000e+00> : vector<2x128xf32>
    %61 = tpu.matmul %59, %60, %cst_30 {dimension_numbers = #tpu.dot_dimension_numbers<[1], [0], [0], [1], [0, 0, 1, 1], [], []>} : vector<2x32xbf16>, vector<32x128xbf16>, vector<2x128xf32> -> vector<2x128xf32>
    %c0_31 = arith.constant 0 : index
    %c0_32 = arith.constant 0 : index
    %62 = vector.load %arg11[%c0_31, %c0_32] : memref<1x128xf32, #tpu.memory_space<vmem>>, vector<1x128xf32>
    %63 = vector.broadcast %62 : vector<1x128xf32> to vector<2x128xf32>
    %64 = arith.addf %61, %63 : vector<2x128xf32>
    %cst_33 = arith.constant 5.000000e-01 : f32
    %65 = vector.broadcast %cst_33 : f32 to vector<2x128xf32>
    %66 = arith.mulf %65, %64 : vector<2x128xf32>
    %cst_34 = arith.constant 0.707106769 : f32
    %67 = vector.broadcast %cst_34 : f32 to vector<2x128xf32>
    %68 = arith.mulf %64, %67 : vector<2x128xf32>
    %69 = math.erf %68 : vector<2x128xf32>
    %cst_35 = arith.constant 1.000000e+00 : f32
    %70 = vector.broadcast %cst_35 : f32 to vector<2x128xf32>
    %71 = arith.addf %70, %69 : vector<2x128xf32>
    %72 = arith.mulf %66, %71 : vector<2x128xf32>
    %73 = arith.truncf %72 : vector<2x128xf32> to vector<2x128xbf16>
    %c0_36 = arith.constant 0 : index
    %c0_37 = arith.constant 0 : index
    %74 = vector.load %arg12[%c0_36, %c0_37] : memref<128x32xbf16, #tpu.memory_space<vmem>>, vector<128x32xbf16>
    %cst_38 = arith.constant dense<0.000000e+00> : vector<2x32xf32>
    %75 = tpu.matmul %73, %74, %cst_38 {dimension_numbers = #tpu.dot_dimension_numbers<[1], [0], [0], [1], [0, 0, 1, 1], [], []>} : vector<2x128xbf16>, vector<128x32xbf16>, vector<2x32xf32> -> vector<2x32xf32>
    %c0_39 = arith.constant 0 : index
    %c0_40 = arith.constant 0 : index
    %76 = vector.load %arg13[%c0_39, %c0_40] : memref<1x32xf32, #tpu.memory_space<vmem>>, vector<1x32xf32>
    %77 = vector.broadcast %76 : vector<1x32xf32> to vector<2x32xf32>
    %78 = arith.addf %75, %77 : vector<2x32xf32>
    %79 = arith.addf %34, %78 : vector<2x32xf32>
    %c0_41 = arith.constant 0 : index
    %c0_42 = arith.constant 0 : index
    %80 = vector.load %arg14[%c0_41, %c0_42] : memref<2x32xf32, #tpu.memory_space<vmem>>, vector<2x32xf32>
    tpu.vector_store %arg14[%c0_41, %c0_42], %79 {strides = array<i32>} : memref<2x32xf32, #tpu.memory_space<vmem>>, vector<2x32xf32>,
    return
  }
  func.func @transform_0(%arg0: i32) -> (i32, i32) {
    %c0_i32 = arith.constant 0 : i32
    %c0_i32_0 = arith.constant 0 : i32
    return %arg0, %c0_i32 : i32, i32
  }
  func.func @transform_1(%arg0: i32) -> (i32, i32) {
    %c0_i32 = arith.constant 0 : i32
    %c0_i32_0 = arith.constant 0 : i32
    %c0_i32_1 = arith.constant 0 : i32
    return %c0_i32, %c0_i32_0 : i32, i32
  }
  func.func @transform_2(%arg0: i32) -> (i32, i32) {
    %c0_i32 = arith.constant 0 : i32
    %c0_i32_0 = arith.constant 0 : i32
    %c0_i32_1 = arith.constant 0 : i32
    return %c0_i32, %c0_i32_0 : i32, i32
  }
  func.func @transform_3(%arg0: i32) -> (i32, i32) {
    %c0_i32 = arith.constant 0 : i32
    %c0_i32_0 = arith.constant 0 : i32
    %c0_i32_1 = arith.constant 0 : i32
    return %c0_i32, %c0_i32_0 : i32, i32
  }
  func.func @transform_4(%arg0: i32) -> (i32, i32) {
    %c0_i32 = arith.constant 0 : i32
    %c0_i32_0 = arith.constant 0 : i32
    %c0_i32_1 = arith.constant 0 : i32
    return %c0_i32, %c0_i32_0 : i32, i32
  }
  func.func @transform_5(%arg0: i32) -> (i32, i32) {
    %c0_i32 = arith.constant 0 : i32
    %c0_i32_0 = arith.constant 0 : i32
    %c0_i32_1 = arith.constant 0 : i32
    return %c0_i32, %c0_i32_0 : i32, i32
  }
  func.func @transform_6(%arg0: i32) -> (i32, i32) {
    %c0_i32 = arith.constant 0 : i32
    %c0_i32_0 = arith.constant 0 : i32
    %c0_i32_1 = arith.constant 0 : i32
    return %c0_i32, %c0_i32_0 : i32, i32
  }
  func.func @transform_7(%arg0: i32) -> (i32, i32) {
    %c0_i32 = arith.constant 0 : i32
    %c0_i32_0 = arith.constant 0 : i32
    %c0_i32_1 = arith.constant 0 : i32
    return %c0_i32, %c0_i32_0 : i32, i32
  }
  func.func @transform_8(%arg0: i32) -> (i32, i32) {
    %c0_i32 = arith.constant 0 : i32
    %c0_i32_0 = arith.constant 0 : i32
    %c0_i32_1 = arith.constant 0 : i32
    return %c0_i32, %c0_i32_0 : i32, i32
  }
  func.func @transform_9(%arg0: i32) -> (i32, i32) {
    %c0_i32 = arith.constant 0 : i32
    %c0_i32_0 = arith.constant 0 : i32
    %c0_i32_1 = arith.constant 0 : i32
    return %c0_i32, %c0_i32_0 : i32, i32
  }
  func.func @transform_10(%arg0: i32) -> (i32, i32) {
    %c0_i32 = arith.constant 0 : i32
    %c0_i32_0 = arith.constant 0 : i32
    %c0_i32_1 = arith.constant 0 : i32
    return %c0_i32, %c0_i32_0 : i32, i32
  }
  func.func @transform_11(%arg0: i32) -> (i32, i32) {
    %c0_i32 = arith.constant 0 : i32
    %c0_i32_0 = arith.constant 0 : i32
    %c0_i32_1 = arith.constant 0 : i32
    return %c0_i32, %c0_i32_0 : i32, i32
  }
  func.func @transform_12(%arg0: i32) -> (i32, i32) {
    %c0_i32 = arith.constant 0 : i32
    %c0_i32_0 = arith.constant 0 : i32
    %c0_i32_1 = arith.constant 0 : i32
    return %c0_i32, %c0_i32_0 : i32, i32
  }
  func.func @transform_13(%arg0: i32) -> (i32, i32) {
    %c0_i32 = arith.constant 0 : i32
    %c0_i32_0 = arith.constant 0 : i32
    return %arg0, %c0_i32 : i32, i32
  }
}

module attributes {stable_mosaic.version = 11 : i64} {
  func.func @maphead_kernel(%arg0: i32, %arg1: memref<16x32xf32, #tpu.memory_space<vmem>>, %arg2: memref<32x8xbf16, #tpu.memory_space<vmem>>, %arg3: memref<8x32xbf16, #tpu.memory_space<vmem>>, %arg4: memref<32x64xbf16, #tpu.memory_space<vmem>>, %arg5: memref<1x64xf32, #tpu.memory_space<vmem>>, %arg6: memref<32x32xbf16, #tpu.memory_space<vmem>>, %arg7: memref<1x32xf32, #tpu.memory_space<vmem>>, %arg8: memref<1x32xf32, #tpu.memory_space<vmem>>, %arg9: memref<1x32xf32, #tpu.memory_space<vmem>>, %arg10: memref<32x128xbf16, #tpu.memory_space<vmem>>, %arg11: memref<1x128xf32, #tpu.memory_space<vmem>>, %arg12: memref<128x32xbf16, #tpu.memory_space<vmem>>, %arg13: memref<1x32xf32, #tpu.memory_space<vmem>>, %arg14: memref<2x32xf32, #tpu.memory_space<vmem>>) attributes {dimension_semantics = [#tpu.dimension_semantics<parallel>], iteration_bounds = array<i64: 1>, scalar_prefetch = 0 : i64, scratch_operands = 0 : i64, tpu.core_type = #tpu.core_type<tc>, window_params = [{transform_indices = @transform_0, window_bounds = array<i64: 16, 32>}, {pipeline_mode = #tpu.pipeline_mode<synchronous>, transform_indices = @transform_1, window_bounds = array<i64: 32, 8>}, {pipeline_mode = #tpu.pipeline_mode<synchronous>, transform_indices = @transform_2, window_bounds = array<i64: 8, 32>}, {pipeline_mode = #tpu.pipeline_mode<synchronous>, transform_indices = @transform_3, window_bounds = array<i64: 32, 64>}, {pipeline_mode = #tpu.pipeline_mode<synchronous>, transform_indices = @transform_4, window_bounds = array<i64: 1, 64>}, {pipeline_mode = #tpu.pipeline_mode<synchronous>, transform_indices = @transform_5, window_bounds = array<i64: 32, 32>}, {pipeline_mode = #tpu.pipeline_mode<synchronous>, transform_indices = @transform_6, window_bounds = array<i64: 1, 32>}, {pipeline_mode = #tpu.pipeline_mode<synchronous>, transform_indices = @transform_7, window_bounds = array<i64: 1, 32>}, {pipeline_mode = #tpu.pipeline_mode<synchronous>, transform_indices = @transform_8, window_bounds = array<i64: 1, 32>}, {pipeline_mode = #tpu.pipeline_mode<synchronous>, transform_indices = @transform_9, window_bounds = array<i64: 32, 128>}, {pipeline_mode = #tpu.pipeline_mode<synchronous>, transform_indices = @transform_10, window_bounds = array<i64: 1, 128>}, {pipeline_mode = #tpu.pipeline_mode<synchronous>, transform_indices = @transform_11, window_bounds = array<i64: 128, 32>}, {pipeline_mode = #tpu.pipeline_mode<synchronous>, transform_indices = @transform_12, window_bounds = array<i64: 1, 32>}, {transform_indices = @transform_13, window_bounds = array<i64: 2, 32>}]} {
    %c0 = arith.constant 0 : index
    %c0_0 = arith.constant 0 : index
    %0 = vector.load %arg1[%c0, %c0_0] : memref<16x32xf32, #tpu.memory_space<vmem>>, vector<16x32xf32>
    %1 = arith.truncf %0 : vector<16x32xf32> to vector<16x32xbf16>
    %c0_1 = arith.constant 0 : index
    %c0_2 = arith.constant 0 : index
    %2 = vector.load %arg4[%c0_1, %c0_2] : memref<32x64xbf16, #tpu.memory_space<vmem>>, vector<32x64xbf16>
    %cst = arith.constant dense<0.000000e+00> : vector<16x64xf32>
    %3 = tpu.matmul %1, %2, %cst {dimension_numbers = #tpu.dot_dimension_numbers<[1], [0], [0], [1], [0, 0, 1, 1], [], []>} : vector<16x32xbf16>, vector<32x64xbf16>, vector<16x64xf32> -> vector<16x64xf32>
    %c0_3 = arith.constant 0 : index
    %c0_4 = arith.constant 0 : index
    %4 = vector.load %arg5[%c0_3, %c0_4] : memref<1x64xf32, #tpu.memory_space<vmem>>, vector<1x64xf32>
    %5 = vector.broadcast %4 : vector<1x64xf32> to vector<16x64xf32>
    %6 = arith.addf %3, %5 : vector<16x64xf32>
    %7 = vector.extract_strided_slice %6 {offsets = [0, 0], sizes = [16, 32], strides = [1, 1]} : vector<16x64xf32> to vector<16x32xf32>
    %8 = vector.extract_strided_slice %6 {offsets = [0, 32], sizes = [16, 32], strides = [1, 1]} : vector<16x64xf32> to vector<16x32xf32>
    %9 = arith.truncf %7 : vector<16x32xf32> to vector<16x32xbf16>
    %c0_5 = arith.constant 0 : index
    %c0_6 = arith.constant 0 : index
    %10 = vector.load %arg2[%c0_5, %c0_6] : memref<32x8xbf16, #tpu.memory_space<vmem>>, vector<32x8xbf16>
    %cst_7 = arith.constant dense<0.000000e+00> : vector<16x8xf32>
    %11 = tpu.matmul %9, %10, %cst_7 {dimension_numbers = #tpu.dot_dimension_numbers<[1], [0], [0], [1], [0, 0, 1, 1], [], []>} : vector<16x32xbf16>, vector<32x8xbf16>, vector<16x8xf32> -> vector<16x8xf32>
    %12 = vector.shape_cast %11 : vector<16x8xf32> to vector<2x8x8xf32>
    %cst_8 = arith.constant dense<0xFF800000> : vector<2x8xf32>
    %13 = vector.multi_reduction <maximumf>, %12, %cst_8 [1] : vector<2x8x8xf32> to vector<2x8xf32>
    %14 = vector.shape_cast %13 : vector<2x8xf32> to vector<2x1x8xf32>
    %15 = vector.broadcast %14 : vector<2x1x8xf32> to vector<2x8x8xf32>
    %16 = arith.subf %12, %15 : vector<2x8x8xf32>
    %17 = math.exp %16 : vector<2x8x8xf32>
    %cst_9 = arith.constant dense<0.000000e+00> : vector<2x8xf32>
    %18 = vector.multi_reduction <add>, %17, %cst_9 [1] : vector<2x8x8xf32> to vector<2x8xf32>
    %19 = vector.shape_cast %18 : vector<2x8xf32> to vector<2x1x8xf32>
    %20 = vector.broadcast %19 : vector<2x1x8xf32> to vector<2x8x8xf32>
    %21 = arith.divf %17, %20 : vector<2x8x8xf32>
    %c0_10 = arith.constant 0 : index
    %c0_11 = arith.constant 0 : index
    %22 = vector.load %arg3[%c0_10, %c0_11] : memref<8x32xbf16, #tpu.memory_space<vmem>>, vector<8x32xbf16>
    %23 = vector.shape_cast %21 : vector<2x8x8xf32> to vector<16x8xf32>
    %24 = arith.truncf %23 : vector<16x8xf32> to vector<16x8xbf16>
    %cst_12 = arith.constant dense<0.000000e+00> : vector<16x32xf32>
    %25 = tpu.matmul %24, %22, %cst_12 {dimension_numbers = #tpu.dot_dimension_numbers<[1], [0], [0], [1], [0, 0, 1, 1], [], []>} : vector<16x8xbf16>, vector<8x32xbf16>, vector<16x32xf32> -> vector<16x32xf32>
    %26 = arith.mulf %25, %8 : vector<16x32xf32>
    %27 = vector.shape_cast %26 : vector<16x32xf32> to vector<2x8x32xf32>
    %cst_13 = arith.constant dense<0.000000e+00> : vector<2x32xf32>
    %28 = vector.multi_reduction <add>, %27, %cst_13 [1] : vector<2x8x32xf32> to vector<2x32xf32>
    %29 = arith.truncf %28 : vector<2x32xf32> to vector<2x32xbf16>
    %c0_14 = arith.constant 0 : index
    %c0_15 = arith.constant 0 : index
    %30 = vector.load %arg6[%c0_14, %c0_15] : memref<32x32xbf16, #tpu.memory_space<vmem>>, vector<32x32xbf16>
    %cst_16 = arith.constant dense<0.000000e+00> : vector<2x32xf32>
    %31 = tpu.matmul %29, %30, %cst_16 {dimension_numbers = #tpu.dot_dimension_numbers<[1], [0], [0], [1], [0, 0, 1, 1], [], []>} : vector<2x32xbf16>, vector<32x32xbf16>, vector<2x32xf32> -> vector<2x32xf32>
    %c0_17 = arith.constant 0 : index
    %c0_18 = arith.constant 0 : index
    %32 = vector.load %arg7[%c0_17, %c0_18] : memref<1x32xf32, #tpu.memory_space<vmem>>, vector<1x32xf32>
    %33 = vector.broadcast %32 : vector<1x32xf32> to vector<2x32xf32>
    %34 = arith.addf %31, %33 : vector<2x32xf32>
    %cst_19 = arith.constant dense<0.000000e+00> : vector<2xf32>
    %35 = vector.multi_reduction <add>, %34, %cst_19 [1] : vector<2x32xf32> to vector<2xf32>
    %36 = vector.shape_cast %35 : vector<2xf32> to vector<2x1xf32>
    %cst_20 = arith.constant 3.200000e+01 : f32
    %37 = vector.broadcast %cst_20 : f32 to vector<2x1xf32>
    %38 = arith.divf %36, %37 : vector<2x1xf32>
    %39 = vector.broadcast %38 : vector<2x1xf32> to vector<2x32xf32>
    %40 = arith.subf %34, %39 : vector<2x32xf32>
    %41 = arith.mulf %40, %40 : vector<2x32xf32>
    %cst_21 = arith.constant dense<0.000000e+00> : vector<2xf32>
    %42 = vector.multi_reduction <add>, %41, %cst_21 [1] : vector<2x32xf32> to vector<2xf32>
    %43 = vector.shape_cast %42 : vector<2xf32> to vector<2x1xf32>
    %cst_22 = arith.constant 3.200000e+01 : f32
    %44 = vector.broadcast %cst_22 : f32 to vector<2x1xf32>
    %45 = arith.divf %43, %44 : vector<2x1xf32>
    %46 = vector.broadcast %38 : vector<2x1xf32> to vector<2x32xf32>
    %47 = arith.subf %34, %46 : vector<2x32xf32>
    %cst_23 = arith.constant 9.99999974E-6 : f32
    %48 = vector.broadcast %cst_23 : f32 to vector<2x1xf32>
    %49 = arith.addf %45, %48 : vector<2x1xf32>
    %50 = math.rsqrt %49 : vector<2x1xf32>
    %51 = vector.broadcast %50 : vector<2x1xf32> to vector<2x32xf32>
    %52 = arith.mulf %47, %51 : vector<2x32xf32>
    %c0_24 = arith.constant 0 : index
    %c0_25 = arith.constant 0 : index
    %53 = vector.load %arg8[%c0_24, %c0_25] : memref<1x32xf32, #tpu.memory_space<vmem>>, vector<1x32xf32>
    %54 = vector.broadcast %53 : vector<1x32xf32> to vector<2x32xf32>
    %55 = arith.mulf %52, %54 : vector<2x32xf32>
    %c0_26 = arith.constant 0 : index
    %c0_27 = arith.constant 0 : index
    %56 = vector.load %arg9[%c0_26, %c0_27] : memref<1x32xf32, #tpu.memory_space<vmem>>, vector<1x32xf32>
    %57 = vector.broadcast %56 : vector<1x32xf32> to vector<2x32xf32>
    %58 = arith.addf %55, %57 : vector<2x32xf32>
    %59 = arith.truncf %58 : vector<2x32xf32> to vector<2x32xbf16>
    %c0_28 = arith.constant 0 : index
    %c0_29 = arith.constant 0 : index
    %60 = vector.load %arg10[%c0_28, %c0_29] : memref<32x128xbf16, #tpu.memory_space<vmem>>, vector<32x128xbf16>
    %cst_30 = arith.constant dense<0.000000e+00> : vector<2x128xf32>
    %61 = tpu.matmul %59, %60, %cst_30 {dimension_numbers = #tpu.dot_dimension_numbers<[1], [0], [0], [1], [0, 0, 1, 1], [], []>} : vector<2x32xbf16>, vector<32x128xbf16>, vector<2x128xf32> -> vector<2x128xf32>
    %c0_31 = arith.constant 0 : index
    %c0_32 = arith.constant 0 : index
    %62 = vector.load %arg11[%c0_31, %c0_32] : memref<1x128xf32, #tpu.memory_space<vmem>>, vector<1x128xf32>
    %63 = vector.broadcast %62 : vector<1x128xf32> to vector<2x128xf32>
    %64 = arith.addf %61, %63 : vector<2x128xf32>
    %cst_33 = arith.constant 5.000000e-01 : f32
    %65 = vector.broadcast %cst_33 : f32 to vector<2x128xf32>
    %66 = arith.mulf %65, %64 : vector<2x128xf32>
    %cst_34 = arith.constant 0.707106769 : f32
    %67 = vector.broadcast %cst_34 : f32 to vector<2x128xf32>
    %68 = arith.mulf %64, %67 : vector<2x128xf32>
    %69 = math.erf %68 : vector<2x128xf32>
    %cst_35 = arith.constant 1.000000e+00 : f32
    %70 = vector.broadcast %cst_35 : f32 to vector<2x128xf32>
    %71 = arith.addf %70, %69 : vector<2x128xf32>
    %72 = arith.mulf %66, %71 : vector<2x128xf32>
    %73 = arith.truncf %72 : vector<2x128xf32> to vector<2x128xbf16>
    %c0_36 = arith.constant 0 : index
    %c0_37 = arith.constant 0 : index
    %74 = vector.load %arg12[%c0_36, %c0_37] : memref<128x32xbf16, #tpu.memory_space<vmem>>, vector<128x32xbf16>
    %cst_38 = arith.constant dense<0.000000e+00> : vector<2x32xf32>
    %75 = tpu.matmul %73, %74, %cst_38 {dimension_numbers = #tpu.dot_dimension_numbers<[1], [0], [0], [1], [0, 0, 1, 1], [], []>} : vector<2x128xbf16>, vector<128x32xbf16>, vector<2x32xf32> -> vector<2x32xf32>
    %c0_39 = arith.constant 0 : index
    %c0_40 = arith.constant 0 : index
    %76 = vector.load %arg13[%c0_39, %c0_40] : memref<1x32xf32, #tpu.memory_space<vmem>>, vector<1x32xf32>
    %77 = vector.broadcast %76 : vector<1x32xf32> to vector<2x32xf32>
    %78 = arith.addf %75, %77 : vector<2x32xf32>
    %79 = arith.addf %34, %78 : vector<2x32xf32>
    %c0_41 = arith.constant 0 : index
    %c0_42 = arith.constant 0 : index
    %80 = vector.load %arg14[%c0_41, %c0_42] : memref<2x32xf32, #tpu.memory_space<vmem>>, vector<2x32xf32>
    tpu.vector_store %arg14[%c0_41, %c0_42], %79 {strides = array<i32>} : memref<2x32xf32, #tpu.memory_space<vmem>>, vector<2x32xf32>,
    return
  }
  func.func @transform_0(%arg0: i32) -> (i32, i32) {
    %c0_i32 = arith.constant 0 : i32
    %c0_i32_0 = arith.constant 0 : i32
    return %arg0, %c0_i32 : i32, i32
  }
  func.func @transform_1(%arg0: i32) -> (i32, i32) {
    %c0_i32 = arith.constant 0 : i32
    %c0_i32_0 = arith.constant 0 : i32
    %c0_i32_1 = arith.constant 0 : i32
    return %c0_i32, %c0_i32_0 : i32, i32
  }
  func.func @transform_2(%arg0: i32) -> (i32, i32) {
    %c0_i32 = arith.constant 0 : i32
    %c0_i32_0 = arith.constant 0 : i32
    %c0_i32_1 = arith.constant 0 : i32
    return %c0_i32, %c0_i32_0 : i32, i32
  }
  func.func @transform_3(%arg0: i32) -> (i32, i32) {
    %c0_i32 = arith.constant 0 : i32
    %c0_i32_0 = arith.constant 0 : i32
    %c0_i32_1 = arith.constant 0 : i32
    return %c0_i32, %c0_i32_0 : i32, i32
  }
  func.func @transform_4(%arg0: i32) -> (i32, i32) {
    %c0_i32 = arith.constant 0 : i32
    %c0_i32_0 = arith.constant 0 : i32
    %c0_i32_1 = arith.constant 0 : i32
    return %c0_i32, %c0_i32_0 : i32, i32
  }
  func.func @transform_5(%arg0: i32) -> (i32, i32) {
    %c0_i32 = arith.constant 0 : i32
    %c0_i32_0 = arith.constant 0 : i32
    %c0_i32_1 = arith.constant 0 : i32
    return %c0_i32, %c0_i32_0 : i32, i32
  }
  func.func @transform_6(%arg0: i32) -> (i32, i32) {
    %c0_i32 = arith.constant 0 : i32
    %c0_i32_0 = arith.constant 0 : i32
    %c0_i32_1 = arith.constant 0 : i32
    return %c0_i32, %c0_i32_0 : i32, i32
  }
  func.func @transform_7(%arg0: i32) -> (i32, i32) {
    %c0_i32 = arith.constant 0 : i32
    %c0_i32_0 = arith.constant 0 : i32
    %c0_i32_1 = arith.constant 0 : i32
    return %c0_i32, %c0_i32_0 : i32, i32
  }
  func.func @transform_8(%arg0: i32) -> (i32, i32) {
    %c0_i32 = arith.constant 0 : i32
    %c0_i32_0 = arith.constant 0 : i32
    %c0_i32_1 = arith.constant 0 : i32
    return %c0_i32, %c0_i32_0 : i32, i32
  }
  func.func @transform_9(%arg0: i32) -> (i32, i32) {
    %c0_i32 = arith.constant 0 : i32
    %c0_i32_0 = arith.constant 0 : i32
    %c0_i32_1 = arith.constant 0 : i32
    return %c0_i32, %c0_i32_0 : i32, i32
  }
  func.func @transform_10(%arg0: i32) -> (i32, i32) {
    %c0_i32 = arith.constant 0 : i32
    %c0_i32_0 = arith.constant 0 : i32
    %c0_i32_1 = arith.constant 0 : i32
    return %c0_i32, %c0_i32_0 : i32, i32
  }
  func.func @transform_11(%arg0: i32) -> (i32, i32) {
    %c0_i32 = arith.constant 0 : i32
    %c0_i32_0 = arith.constant 0 : i32
    %c0_i32_1 = arith.constant 0 : i32
    return %c0_i32, %c0_i32_0 : i32, i32
  }
  func.func @transform_12(%arg0: i32) -> (i32, i32) {
    %c0_i32 = arith.constant 0 : i32
    %c0_i32_0 = arith.constant 0 : i32
    %c0_i32_1 = arith.constant 0 : i32
    return %c0_i32, %c0_i32_0 : i32, i32
  }
  func.func @transform_13(%arg0: i32) -> (i32, i32) {
    %c0_i32 = arith.constant 0 : i32
    %c0_i32_0 = arith.constant 0 : i32
    return %arg0, %c0_i32 : i32, i32
  }
}

</mosaic_0001>

<llo_original>
// kernel: tpu_custom_call.1
$region0: #{tpu_custom_call.1}
  #allocation0 [shape = 'u32[]', space=smem, size = 0x4, offset = 0x4, fixed_abs, tag = 'smem constant byte address 0x4 - core index']
  #allocation1 [shape = 'u32[144,128]{1,0:T(1,128)}', space=vmem, size = 0x12000, scoped, tag = 'internal scratch']
  %s0 = inlined_call_operand.vmem [shape: f32[16,32], index: 0, kind: input, shape index: {}]
  %s1 = inlined_call_operand.vmem [shape: bf16[32,8], index: 1, kind: input, shape index: {}]
  %s2 = inlined_call_operand.vmem [shape: bf16[8,32], index: 2, kind: input, shape index: {}]
  %s3 = inlined_call_operand.vmem [shape: bf16[32,64], index: 3, kind: input, shape index: {}]
  %s4 = inlined_call_operand.vmem [shape: f32[1,64], index: 4, kind: input, shape index: {}]
  %s5 = inlined_call_operand.vmem [shape: bf16[32,32], index: 5, kind: input, shape index: {}]
  %s6 = inlined_call_operand.vmem [shape: f32[1,32], index: 6, kind: input, shape index: {}]
  %s7 = inlined_call_operand.vmem [shape: f32[1,32], index: 7, kind: input, shape index: {}]
  %s8 = inlined_call_operand.vmem [shape: f32[1,32], index: 8, kind: input, shape index: {}]
  %s9 = inlined_call_operand.vmem [shape: bf16[32,128], index: 9, kind: input, shape index: {}]
  %s10 = inlined_call_operand.vmem [shape: f32[1,128], index: 10, kind: input, shape index: {}]
  %s11 = inlined_call_operand.vmem [shape: bf16[128,32], index: 11, kind: input, shape index: {}]
  %s12 = inlined_call_operand.vmem [shape: f32[1,32], index: 12, kind: input, shape index: {}]
  %s13 = inlined_call_operand.hbm [shape: f32[2,32], index: 13, kind: output, shape index: {}]
  %s14 = sld [smem:[#allocation0]]
  $region62: #{tpu_custom_call.1} parent=0
    _
  %s16 = ssub.s32 1, %s14
  %s17 = scalar_select 0, %s16, %s14
  $region1: #{tpu_custom_call.1} parent=0
    #allocation2 [shape = 'u8[1024]{0}', space=vmem, size = 0x400, scoped, tag = 'output window, operand 0, single buffered']
    #allocation3 [shape = 's32[1]{0}', space=sflag, size = 0x4, scoped, tag = 'scoped memory for tpu_custom_call.1']
    %18 = vsyncpa [#allocation3], 0
    // Predicated region
    $region2: #{tpu_custom_call.1} parent=1 // pred_check
      _
    $region3: #{tpu_custom_call.1} parent=1 // pred_check_branch
      %20 = sbr.rel (0) target = $region5
    $region4: #{tpu_custom_call.1} parent=1 // pred_region
      _
    $region5: #{tpu_custom_call.1} parent=1 // pred_fallthru
      _
    // Predicated region
    $region6: #{tpu_custom_call.1} parent=1 // pred_check
      _
    $region7: #{tpu_custom_call.1} parent=1 // pred_check_branch
      %22 = sbr.rel (0) target = $region9
    $region8: #{tpu_custom_call.1} parent=1 // pred_region
      _
    $region9: #{tpu_custom_call.1} parent=1 // pred_fallthru
      _
    // Predicated region
    $region10: #{tpu_custom_call.1} parent=1 // pred_check
      _
    $region11: #{tpu_custom_call.1} parent=1 // pred_check_branch
      %24 = sbr.rel (0) target = $region13
    $region12: #{tpu_custom_call.1} parent=1 // pred_region
      _
    $region13: #{tpu_custom_call.1} parent=1 // pred_fallthru
      _
    // Predicated region
    $region14: #{tpu_custom_call.1} parent=1 // pred_check
      _
    $region15: #{tpu_custom_call.1} parent=1 // pred_check_branch
      %26 = sbr.rel (0) target = $region17
    $region16: #{tpu_custom_call.1} parent=1 // pred_region
      _
    $region17: #{tpu_custom_call.1} parent=1 // pred_fallthru
      _
    // Predicated region
    $region18: #{tpu_custom_call.1} parent=1 // pred_check
      _
    $region19: #{tpu_custom_call.1} parent=1 // pred_check_branch
      %28 = sbr.rel (0) target = $region21
    $region20: #{tpu_custom_call.1} parent=1 // pred_region
      _
    $region21: #{tpu_custom_call.1} parent=1 // pred_fallthru
      _
    // Predicated region
    $region22: #{tpu_custom_call.1} parent=1 // pred_check
      _
    $region23: #{tpu_custom_call.1} parent=1 // pred_check_branch
      %30 = sbr.rel (0) target = $region25
    $region24: #{tpu_custom_call.1} parent=1 // pred_region
      _
    $region25: #{tpu_custom_call.1} parent=1 // pred_fallthru
      _
    // Predicated region
    $region26: #{tpu_custom_call.1} parent=1 // pred_check
      _
    $region27: #{tpu_custom_call.1} parent=1 // pred_check_branch
      %32 = sbr.rel (0) target = $region29
    $region28: #{tpu_custom_call.1} parent=1 // pred_region
      _
    $region29: #{tpu_custom_call.1} parent=1 // pred_fallthru
      _
    // Predicated region
    $region30: #{tpu_custom_call.1} parent=1 // pred_check
      _
    $region31: #{tpu_custom_call.1} parent=1 // pred_check_branch
      %34 = sbr.rel (0) target = $region33
    $region32: #{tpu_custom_call.1} parent=1 // pred_region
      _
    $region33: #{tpu_custom_call.1} parent=1 // pred_fallthru
      _
    // Predicated region
    $region34: #{tpu_custom_call.1} parent=1 // pred_check
      _
    $region35: #{tpu_custom_call.1} parent=1 // pred_check_branch
      %36 = sbr.rel (0) target = $region37
    $region36: #{tpu_custom_call.1} parent=1 // pred_region
      _
    $region37: #{tpu_custom_call.1} parent=1 // pred_fallthru
      _
    // Predicated region
    $region38: #{tpu_custom_call.1} parent=1 // pred_check
      _
    $region39: #{tpu_custom_call.1} parent=1 // pred_check_branch
      %38 = sbr.rel (0) target = $region41
    $region40: #{tpu_custom_call.1} parent=1 // pred_region
      _
    $region41: #{tpu_custom_call.1} parent=1 // pred_fallthru
      _
    // Predicated region
    $region42: #{tpu_custom_call.1} parent=1 // pred_check
      _
    $region43: #{tpu_custom_call.1} parent=1 // pred_check_branch
      %40 = sbr.rel (0) target = $region45
    $region44: #{tpu_custom_call.1} parent=1 // pred_region
      _
    $region45: #{tpu_custom_call.1} parent=1 // pred_fallthru
      _
    // Predicated region
    $region46: #{tpu_custom_call.1} parent=1 // pred_check
      _
    $region47: #{tpu_custom_call.1} parent=1 // pred_check_branch
      %42 = sbr.rel (0) target = $region49
    $region48: #{tpu_custom_call.1} parent=1 // pred_region
      _
    $region49: #{tpu_custom_call.1} parent=1 // pred_fallthru
      _
    // Predicated region
    $region50: #{tpu_custom_call.1} parent=1 // pred_check
      _
    $region51: #{tpu_custom_call.1} parent=1 // pred_check_branch
      %44 = sbr.rel (0) target = $region53
    $region52: #{tpu_custom_call.1} parent=1 // pred_region
      _
    $region53: #{tpu_custom_call.1} parent=1 // pred_fallthru
      _
    %v46 = vld [vmem:[%s0] sm:$0xff]
    %v47 = vld [vmem:[%s0 + $0x8] sm:$0xff]
    %v48 = vpack.c.bf16 %v47, %v46
    %v49 = vld [vmem:[%s3] sm:$0xf]
    %v50 = vld [vmem:[%s3 + $0x4] sm:$0xf]
    %v51 = vld [vmem:[%s3 + $0x8] sm:$0xf]
    %v52 = vld [vmem:[%s3 + $0xc] sm:$0xf]
    %v53 = vld [vmem:[%s4] sm:$0x1]
    %v55 = vlaneseq
    %v56 = vshrl.u32 %v55, 7
    %v57 = vsub.s32 0, %v56
    %v58 = vrot.slane %v53, %v57
    %v64 = vunpack.c.l.b16 %v49
    %v65 = vunpack.c.l.b16 %v50
    %v66 = vunpack.c.l.b16 %v51
    %v67 = vunpack.c.l.b16 %v52
    %v68 = vpack.c.b16 %v65, %v64
    %v69 = vpack.c.b16 %v67, %v66
    %vm72 = vcmask 261120
    %v74 = vsel %vm72, %v48, 0
    %76 = vmatprep.subr.bf16.mxu0 0
    %77 = vmatpush1.bf16.msra.mxu0 %v68
    %78 = vmatprep.subr.bf16.mxu0 0
    %79 = vmatpush1.bf16.msra.mxu0 %v69
    %80 = vmatprep.subr.bf16.mxu0 0
    %81 = vmatpush1.bf16.msra.mxu0 0
    %82 = vmatprep.subr.bf16.mxu0 0
    %83 = vmatpush1.bf16.msra.mxu0 0
    %84 = vmatprep.subr.bf16.mxu0 0
    %85 = vmatpush1.bf16.msra.mxu0 0
    %86 = vmatprep.subr.bf16.mxu0 0
    %87 = vmatpush1.bf16.msra.mxu0 0
    %88 = vmatprep.subr.bf16.mxu0 0
    %89 = vmatpush1.bf16.msra.mxu0 0
    %90 = vmatprep.subr.bf16.mxu0 0
    %91 = vmatpush1.bf16.msra.mxu0 0
    %92 = vmatprep.subr.bf16.mxu0 0
    %93 = vmatpush1.bf16.msra.mxu0 0
    %94 = vmatprep.subr.bf16.mxu0 0
    %95 = vmatpush1.bf16.msra.mxu0 0
    %96 = vmatprep.subr.bf16.mxu0 0
    %97 = vmatpush1.bf16.msra.mxu0 0
    %98 = vmatprep.subr.bf16.mxu0 0
    %99 = vmatpush1.bf16.msra.mxu0 0
    %100 = vmatprep.subr.bf16.mxu0 0
    %101 = vmatpush1.bf16.msra.mxu0 0
    %102 = vmatprep.subr.bf16.mxu0 0
    %103 = vmatpush1.bf16.msra.mxu0 0
    %104 = vmatprep.subr.bf16.mxu0 0
    %105 = vmatpush1.bf16.msra.mxu0 0
    %106 = vmatprep.subr.bf16.mxu0 0
    %107 = vmatpush1.bf16.msra.mxu0 0
    %108 = vmatprep.mubr.bf16.mxu0 0
    %109 = vmatmul.mubr.bf16.gmra.mrb[0].mxu0 %v74
    %v110 = vpop.f32.mrb[0].mxu0
    %v111 = vadd.f32 %v58, %v110
    %v112 = vpop.f32.mrb[0].mxu0
    %v113 = vpop.f32.mrb[0].mxu0
    %v114 = vadd.f32 %v58, %v113
    %v115 = vpop.f32.mrb[0].mxu0
    %116 = vdwg.mxu0
    %v117 = vpack.c.bf16 %v114, %v111
    %v118 = vld [vmem:[%s1] sm:$0xf]
    %v119 = vld [vmem:[%s1 + $0x4] sm:$0xf]
    %v120 = vld [vmem:[%s1 + $0x8] sm:$0xf]
    %v121 = vld [vmem:[%s1 + $0xc] sm:$0xf]
    %v126 = vunpack.c.l.b16 %v118
    %v127 = vunpack.c.l.b16 %v119
    %v128 = vunpack.c.l.b16 %v120
    %v129 = vunpack.c.l.b16 %v121
    %v130 = vpack.c.b16 %v127, %v126
    %v131 = vpack.c.b16 %v129, %v128
    %v135 = vsel %vm72, %v117, 0
    %137 = vmatprep.subr.bf16.mxu0 0
    %138 = vmatpush1.bf16.msra.mxu0 %v130
    %139 = vmatprep.subr.bf16.mxu0 0
    %140 = vmatpush1.bf16.msra.mxu0 %v131
    %141 = vmatprep.subr.bf16.mxu0 0
    %142 = vmatpush1.bf16.msra.mxu0 0
    %143 = vmatprep.subr.bf16.mxu0 0
    %144 = vmatpush1.bf16.msra.mxu0 0
    %145 = vmatprep.subr.bf16.mxu0 0
    %146 = vmatpush1.bf16.msra.mxu0 0
    %147 = vmatprep.subr.bf16.mxu0 0
    %148 = vmatpush1.bf16.msra.mxu0 0
    %149 = vmatprep.subr.bf16.mxu0 0
    %150 = vmatpush1.bf16.msra.mxu0 0
    %151 = vmatprep.subr.bf16.mxu0 0
    %152 = vmatpush1.bf16.msra.mxu0 0
    %153 = vmatprep.subr.bf16.mxu0 0
    %154 = vmatpush1.bf16.msra.mxu0 0
    %155 = vmatprep.subr.bf16.mxu0 0
    %156 = vmatpush1.bf16.msra.mxu0 0
    %157 = vmatprep.subr.bf16.mxu0 0
    %158 = vmatpush1.bf16.msra.mxu0 0
    %159 = vmatprep.subr.bf16.mxu0 0
    %160 = vmatpush1.bf16.msra.mxu0 0
    %161 = vmatprep.subr.bf16.mxu0 0
    %162 = vmatpush1.bf16.msra.mxu0 0
    %163 = vmatprep.subr.bf16.mxu0 0
    %164 = vmatpush1.bf16.msra.mxu0 0
    %165 = vmatprep.subr.bf16.mxu0 0
    %166 = vmatpush1.bf16.msra.mxu0 0
    %167 = vmatprep.subr.bf16.mxu0 0
    %168 = vmatpush1.bf16.msra.mxu0 0
    %169 = vmatprep.mubr.bf16.mxu0 0
    %170 = vmatmul.mubr.bf16.gmra.mrb[0].mxu0 %v135
    %v171 = vpop.f32.mrb[0].mxu0
    %v172 = vadd.f32 0.0, %v171
    %v173 = vpop.f32.mrb[0].mxu0
    %v174 = vpop.f32.mrb[0].mxu0
    %v175 = vadd.f32 0.0, %v174
    %v176 = vpop.f32.mrb[0].mxu0
    %177 = vdwg.mxu0
    %vm178 = vcmask 64512
    %v179 = vsel %vm178, %v172, -inf
    %v180 = vrot.slane %v179, 4
    %v181 = vmax.f32 %v179, %v180
    %v182 = vrot.slane %v181, 2
    %v183 = vmax.f32 %v181, %v182
    %v184 = vrot.slane %v183, 1
    %v185 = vmax.f32 %v183, %v184
    %v186 = vsel %vm178, %v175, -inf
    %v187 = vrot.slane %v186, 4
    %v188 = vmax.f32 %v186, %v187
    %v189 = vrot.slane %v188, 2
    %v190 = vmax.f32 %v188, %v189
    %v191 = vrot.slane %v190, 1
    %v192 = vmax.f32 %v190, %v191
    %v193 = vsub.f32 %v172, %v185
    %v194 = vsub.f32 %v175, %v192
    %v195 = vmul.f32 %v193, 1.442695
    %v196 = vpow.pop %v195
    %v197 = vmul.f32 %v194, 1.442695
    %v198 = vpow.pop %v197
    %v199 = vsel %vm178, %v196, 0.0
    %v200 = vrot.slane %v199, 4
    %v201 = vadd.f32 %v199, %v200
    %v202 = vrot.slane %v201, 2
    %v203 = vadd.f32 %v201, %v202
    %v204 = vrot.slane %v203, 1
    %v205 = vadd.f32 %v203, %v204
    %v206 = vsel %vm178, %v198, 0.0
    %v207 = vrot.slane %v206, 4
    %v208 = vadd.f32 %v206, %v207
    %v209 = vrot.slane %v208, 2
    %v210 = vadd.f32 %v208, %v209
    %v211 = vrot.slane %v210, 1
    %v212 = vadd.f32 %v210, %v211
    %v213 = vrcp.pop %v205
    %v214 = vmul.f32 %v196, %v213
    %v215 = vrcp.pop %v212
    %v216 = vmul.f32 %v198, %v215
    %v217 = vld [vmem:[%s2] sm:$0xf]
    %v218 = vpack.c.bf16 %v216, %v214
    %v220 = vsel %vm178, %v218, 0
    %vm222 = vcmask 1043456
    %v224 = vsel %vm222, %v217, 0
    %226 = vmatprep.subr.bf16.mxu0 0
    %227 = vmatpush1.bf16.msra.mxu0 %v224
    %228 = vmatprep.subr.bf16.mxu0 0
    %229 = vmatpush1.bf16.msra.mxu0 0
    %230 = vmatprep.subr.bf16.mxu0 0
    %231 = vmatpush1.bf16.msra.mxu0 0
    %232 = vmatprep.subr.bf16.mxu0 0
    %233 = vmatpush1.bf16.msra.mxu0 0
    %234 = vmatprep.subr.bf16.mxu0 0
    %235 = vmatpush1.bf16.msra.mxu0 0
    %236 = vmatprep.subr.bf16.mxu0 0
    %237 = vmatpush1.bf16.msra.mxu0 0
    %238 = vmatprep.subr.bf16.mxu0 0
    %239 = vmatpush1.bf16.msra.mxu0 0
    %240 = vmatprep.subr.bf16.mxu0 0
    %241 = vmatpush1.bf16.msra.mxu0 0
    %242 = vmatprep.subr.bf16.mxu0 0
    %243 = vmatpush1.bf16.msra.mxu0 0
    %244 = vmatprep.subr.bf16.mxu0 0
    %245 = vmatpush1.bf16.msra.mxu0 0
    %246 = vmatprep.subr.bf16.mxu0 0
    %247 = vmatpush1.bf16.msra.mxu0 0
    %248 = vmatprep.subr.bf16.mxu0 0
    %249 = vmatpush1.bf16.msra.mxu0 0
    %250 = vmatprep.subr.bf16.mxu0 0
    %251 = vmatpush1.bf16.msra.mxu0 0
    %252 = vmatprep.subr.bf16.mxu0 0
    %253 = vmatpush1.bf16.msra.mxu0 0
    %254 = vmatprep.subr.bf16.mxu0 0
    %255 = vmatpush1.bf16.msra.mxu0 0
    %256 = vmatprep.subr.bf16.mxu0 0
    %257 = vmatpush1.bf16.msra.mxu0 0
    %258 = vmatprep.mubr.bf16.mxu0 0
    %259 = vmatmul.mubr.bf16.gmra.mrb[0].mxu0 %v220
    %v260 = vpop.f32.mrb[0].mxu0
    %v261 = vadd.f32 0.0, %v260
    %v262 = vpop.f32.mrb[0].mxu0
    %v263 = vpop.f32.mrb[0].mxu0
    %v264 = vadd.f32 0.0, %v263
    %v265 = vpop.f32.mrb[0].mxu0
    %266 = vdwg.mxu0
    %269 = vrot.lane.b32.xlu0 %v111, 96
    %v270 = vpop.permute.xlu0 %269
    %271 = vrot.lane.b32.xlu0 %v114, 96
    %v272 = vpop.permute.xlu0 %271
    %v275 = vmul.f32 %v261, %v270
    %v276 = vmul.f32 %v264, %v272
    %v277 = vsel %vm72, %v275, 0.0
    %v278 = vrot.slane %v277, 4
    %v279 = vadd.f32 %v277, %v278
    %v280 = vrot.slane %v279, 2
    %v281 = vadd.f32 %v279, %v280
    %v282 = vrot.slane %v281, 1
    %v283 = vadd.f32 %v281, %v282
    %v284 = vsel %vm72, %v276, 0.0
    %v285 = vrot.slane %v284, 4
    %v286 = vadd.f32 %v284, %v285
    %v287 = vrot.slane %v286, 2
    %v288 = vadd.f32 %v286, %v287
    %v289 = vrot.slane %v288, 1
    %v290 = vadd.f32 %v288, %v289
    %v291 = vpack.c.bf16 %v283, %v283
    %v292 = vpack.c.bf16 %v290, %v290
    %v293 = vld [vmem:[%s5] sm:$0xf]
    %v294 = vld [vmem:[%s5 + $0x4] sm:$0xf]
    %v295 = vld [vmem:[%s5 + $0x8] sm:$0xf]
    %v296 = vld [vmem:[%s5 + $0xc] sm:$0xf]
    %v297 = vld [vmem:[%s6] sm:$0x1]
    %v299 = vlaneseq
    %v300 = vshrl.u32 %v299, 7
    %v301 = vsub.s32 0, %v300
    %v302 = vrot.slane %v297, %v301
    %v306 = vunpack.c.l.b16 %v291
    %v307 = vunpack.c.l.b16 %v292
    %vm308 = vcmask 1041409
    %v309 = vsel %vm308, %v307, %v306
    %v310 = vpack.c.b16 %v309, %v309
    %v315 = vunpack.c.l.b16 %v293
    %v316 = vunpack.c.l.b16 %v294
    %v317 = vunpack.c.l.b16 %v295
    %v318 = vunpack.c.l.b16 %v296
    %v319 = vpack.c.b16 %v316, %v315
    %v320 = vpack.c.b16 %v318, %v317
    %v324 = vsel %vm72, %v310, 0
    %326 = vmatprep.subr.bf16.mxu0 0
    %327 = vmatpush1.bf16.msra.mxu0 %v319
    %328 = vmatprep.subr.bf16.mxu0 0
    %329 = vmatpush1.bf16.msra.mxu0 %v320
    %330 = vmatprep.subr.bf16.mxu0 0
    %331 = vmatpush1.bf16.msra.mxu0 0
    %332 = vmatprep.subr.bf16.mxu0 0
    %333 = vmatpush1.bf16.msra.mxu0 0
    %334 = vmatprep.subr.bf16.mxu0 0
    %335 = vmatpush1.bf16.msra.mxu0 0
    %336 = vmatprep.subr.bf16.mxu0 0
    %337 = vmatpush1.bf16.msra.mxu0 0
    %338 = vmatprep.subr.bf16.mxu0 0
    %339 = vmatpush1.bf16.msra.mxu0 0
    %340 = vmatprep.subr.bf16.mxu0 0
    %341 = vmatpush1.bf16.msra.mxu0 0
    %342 = vmatprep.subr.bf16.mxu0 0
    %343 = vmatpush1.bf16.msra.mxu0 0
    %344 = vmatprep.subr.bf16.mxu0 0
    %345 = vmatpush1.bf16.msra.mxu0 0
    %346 = vmatprep.subr.bf16.mxu0 0
    %347 = vmatpush1.bf16.msra.mxu0 0
    %348 = vmatprep.subr.bf16.mxu0 0
    %349 = vmatpush1.bf16.msra.mxu0 0
    %350 = vmatprep.subr.bf16.mxu0 0
    %351 = vmatpush1.bf16.msra.mxu0 0
    %352 = vmatprep.subr.bf16.mxu0 0
    %353 = vmatpush1.bf16.msra.mxu0 0
    %354 = vmatprep.subr.bf16.mxu0 0
    %355 = vmatpush1.bf16.msra.mxu0 0
    %356 = vmatprep.subr.bf16.mxu0 0
    %357 = vmatpush1.bf16.msra.mxu0 0
    %358 = vmatprep.mubr.bf16.mxu0 0
    %359 = vmatmul.mubr.bf16.gmra.mrb[0].mxu0 %v324
    %v360 = vpop.f32.mrb[0].mxu0
    %v361 = vadd.f32 %v302, %v360
    %v362 = vpop.f32.mrb[0].mxu0
    %v363 = vpop.f32.mrb[0].mxu0
    %v364 = vpop.f32.mrb[0].mxu0
    %365 = vdwg.mxu0
    %vm366 = vcmask 254976
    %v367 = vsel %vm366, %v361, 0.0
    %368 = vadd.xlane.f32.xlu0 %v367
    %v369 = vpop.xlane.xlu0 %368
    %v370 = vrcp.pop 32.0
    %v371 = vmul.f32 %v369, %v370
    %v372 = vsub.f32 %v361, %v371
    %v373 = vmul.f32 %v372, %v372
    %v374 = vsel %vm366, %v373, 0.0
    %375 = vadd.xlane.f32.xlu0 %v374
    %v376 = vpop.xlane.xlu0 %375
    %v377 = vmul.f32 %v376, %v370
    %v378 = vadd.f32 %v377, 1e-05
    %v379 = vrsqrt.pop %v378
    %v380 = vmul.f32 %v372, %v379
    %v381 = vld [vmem:[%s7] sm:$0x1]
    %v383 = vlaneseq
    %v384 = vshrl.u32 %v383, 7
    %v385 = vsub.s32 0, %v384
    %v386 = vrot.slane %v381, %v385
    %v388 = vmul.f32 %v380, %v386
    %v389 = vld [vmem:[%s8] sm:$0x1]
    %v391 = vlaneseq
    %v392 = vshrl.u32 %v391, 7
    %v393 = vsub.s32 0, %v392
    %v394 = vrot.slane %v389, %v393
    %v396 = vadd.f32 %v388, %v394
    %v397 = vpack.c.bf16 %v396, %v396
    %v398 = vld [vmem:[%s9] sm:$0xf]
    %v399 = vld [vmem:[%s9 + $0x4] sm:$0xf]
    %v400 = vld [vmem:[%s9 + $0x8] sm:$0xf]
    %v401 = vld [vmem:[%s9 + $0xc] sm:$0xf]
    %v402 = vld [vmem:[%s10] sm:$0x1]
    %v404 = vlaneseq
    %v405 = vshrl.u32 %v404, 7
    %v406 = vsub.s32 0, %v405
    %v407 = vrot.slane %v402, %v406
    %v413 = vunpack.c.l.b16 %v398
    %v414 = vunpack.c.l.b16 %v399
    %v415 = vunpack.c.l.b16 %v400
    %v416 = vunpack.c.l.b16 %v401
    %v417 = vpack.c.b16 %v414, %v413
    %v418 = vpack.c.b16 %v416, %v415
    %v422 = vsel %vm72, %v397, 0
    %424 = vmatprep.subr.bf16.mxu0 0
    %425 = vmatpush1.bf16.msra.mxu0 %v417
    %426 = vmatprep.subr.bf16.mxu0 0
    %427 = vmatpush1.bf16.msra.mxu0 %v418
    %428 = vmatprep.subr.bf16.mxu0 0
    %429 = vmatpush1.bf16.msra.mxu0 0
    %430 = vmatprep.subr.bf16.mxu0 0
    %431 = vmatpush1.bf16.msra.mxu0 0
    %432 = vmatprep.subr.bf16.mxu0 0
    %433 = vmatpush1.bf16.msra.mxu0 0
    %434 = vmatprep.subr.bf16.mxu0 0
    %435 = vmatpush1.bf16.msra.mxu0 0
    %436 = vmatprep.subr.bf16.mxu0 0
    %437 = vmatpush1.bf16.msra.mxu0 0
    %438 = vmatprep.subr.bf16.mxu0 0
    %439 = vmatpush1.bf16.msra.mxu0 0
    %440 = vmatprep.subr.bf16.mxu0 0
    %441 = vmatpush1.bf16.msra.mxu0 0
    %442 = vmatprep.subr.bf16.mxu0 0
    %443 = vmatpush1.bf16.msra.mxu0 0
    %444 = vmatprep.subr.bf16.mxu0 0
    %445 = vmatpush1.bf16.msra.mxu0 0
    %446 = vmatprep.subr.bf16.mxu0 0
    %447 = vmatpush1.bf16.msra.mxu0 0
    %448 = vmatprep.subr.bf16.mxu0 0
    %449 = vmatpush1.bf16.msra.mxu0 0
    %450 = vmatprep.subr.bf16.mxu0 0
    %451 = vmatpush1.bf16.msra.mxu0 0
    %452 = vmatprep.subr.bf16.mxu0 0
    %453 = vmatpush1.bf16.msra.mxu0 0
    %454 = vmatprep.subr.bf16.mxu0 0
    %455 = vmatpush1.bf16.msra.mxu0 0
    %456 = vmatprep.mubr.bf16.mxu0 0
    %457 = vmatmul.mubr.bf16.gmra.mrb[0].mxu0 %v422
    %v458 = vpop.f32.mrb[0].mxu0
    %v459 = vadd.f32 %v407, %v458
    %v460 = vpop.f32.mrb[0].mxu0
    %v461 = vpop.f32.mrb[0].mxu0
    %v462 = vpop.f32.mrb[0].mxu0
    %463 = vdwg.mxu0
    %v464 = vmul.f32 %v459, 0.5
    %v465 = vmul.f32 %v459, 0.70710677
    %v466 = verf.f32.pop %v465
    %v467 = vadd.f32 %v466, 1.0
    %v468 = vmul.f32 %v464, %v467
    %v469 = vpack.c.bf16 %v468, %v468
    %v470 = vld [vmem:[%s11] sm:$0xf]
    %v471 = vld [vmem:[%s11 + $0x4] sm:$0xf]
    %v472 = vld [vmem:[%s11 + $0x8] sm:$0xf]
    %v473 = vld [vmem:[%s11 + $0xc] sm:$0xf]
    %v474 = vld [vmem:[%s11 + $0x10] sm:$0xf]
    %v475 = vld [vmem:[%s11 + $0x14] sm:$0xf]
    %v476 = vld [vmem:[%s11 + $0x18] sm:$0xf]
    %v477 = vld [vmem:[%s11 + $0x1c] sm:$0xf]
    %v478 = vld [vmem:[%s11 + $0x20] sm:$0xf]
    %v479 = vld [vmem:[%s11 + $0x24] sm:$0xf]
    %v480 = vld [vmem:[%s11 + $0x28] sm:$0xf]
    %v481 = vld [vmem:[%s11 + $0x2c] sm:$0xf]
    %v482 = vld [vmem:[%s11 + $0x30] sm:$0xf]
    %v483 = vld [vmem:[%s11 + $0x34] sm:$0xf]
    %v484 = vld [vmem:[%s11 + $0x38] sm:$0xf]
    %v485 = vld [vmem:[%s11 + $0x3c] sm:$0xf]
    %v486 = vld [vmem:[%s12] sm:$0x1]
    %v488 = vlaneseq
    %v489 = vshrl.u32 %v488, 7
    %v490 = vsub.s32 0, %v489
    %v491 = vrot.slane %v486, %v490
    %v509 = vunpack.c.l.b16 %v470
    %v510 = vunpack.c.l.b16 %v471
    %v511 = vunpack.c.l.b16 %v472
    %v512 = vunpack.c.l.b16 %v473
    %v513 = vunpack.c.l.b16 %v474
    %v514 = vunpack.c.l.b16 %v475
    %v515 = vunpack.c.l.b16 %v476
    %v516 = vunpack.c.l.b16 %v477
    %v517 = vunpack.c.l.b16 %v478
    %v518 = vunpack.c.l.b16 %v479
    %v519 = vunpack.c.l.b16 %v480
    %v520 = vunpack.c.l.b16 %v481
    %v521 = vunpack.c.l.b16 %v482
    %v522 = vunpack.c.l.b16 %v483
    %v523 = vunpack.c.l.b16 %v484
    %v524 = vunpack.c.l.b16 %v485
    %v525 = vpack.c.b16 %v510, %v509
    %v526 = vpack.c.b16 %v512, %v511
    %v527 = vpack.c.b16 %v514, %v513
    %v528 = vpack.c.b16 %v516, %v515
    %v529 = vpack.c.b16 %v518, %v517
    %v530 = vpack.c.b16 %v520, %v519
    %v531 = vpack.c.b16 %v522, %v521
    %v532 = vpack.c.b16 %v524, %v523
    %541 = vmatprep.subr.bf16.mxu0 0
    %542 = vmatpush1.bf16.msra.mxu0 %v525
    %543 = vmatprep.subr.bf16.mxu0 0
    %544 = vmatpush1.bf16.msra.mxu0 %v526
    %545 = vmatprep.subr.bf16.mxu0 0
    %546 = vmatpush1.bf16.msra.mxu0 %v527
    %547 = vmatprep.subr.bf16.mxu0 0
    %548 = vmatpush1.bf16.msra.mxu0 %v528
    %549 = vmatprep.subr.bf16.mxu0 0
    %550 = vmatpush1.bf16.msra.mxu0 %v529
    %551 = vmatprep.subr.bf16.mxu0 0
    %552 = vmatpush1.bf16.msra.mxu0 %v530
    %553 = vmatprep.subr.bf16.mxu0 0
    %554 = vmatpush1.bf16.msra.mxu0 %v531
    %555 = vmatprep.subr.bf16.mxu0 0
    %556 = vmatpush1.bf16.msra.mxu0 %v532
    %557 = vmatprep.subr.bf16.mxu0 0
    %558 = vmatpush1.bf16.msra.mxu0 0
    %559 = vmatprep.subr.bf16.mxu0 0
    %560 = vmatpush1.bf16.msra.mxu0 0
    %561 = vmatprep.subr.bf16.mxu0 0
    %562 = vmatpush1.bf16.msra.mxu0 0
    %563 = vmatprep.subr.bf16.mxu0 0
    %564 = vmatpush1.bf16.msra.mxu0 0
    %565 = vmatprep.subr.bf16.mxu0 0
    %566 = vmatpush1.bf16.msra.mxu0 0
    %567 = vmatprep.subr.bf16.mxu0 0
    %568 = vmatpush1.bf16.msra.mxu0 0
    %569 = vmatprep.subr.bf16.mxu0 0
    %570 = vmatpush1.bf16.msra.mxu0 0
    %571 = vmatprep.subr.bf16.mxu0 0
    %572 = vmatpush1.bf16.msra.mxu0 0
    %573 = vmatprep.mubr.bf16.mxu0 0
    %574 = vmatmul.mubr.bf16.gmra.mrb[0].mxu0 %v469
    %v575 = vpop.f32.mrb[0].mxu0
    %v576 = vadd.f32 %v491, %v575
    %v577 = vpop.f32.mrb[0].mxu0
    %v578 = vpop.f32.mrb[0].mxu0
    %v579 = vpop.f32.mrb[0].mxu0
    %580 = vdwg.mxu0
    %v581 = vadd.f32 %v361, %v576
    %582 = vst.msk [vmem:[#allocation2] sm:$0x3] %vm366, %v581
    // Predicated region
    $region54: #{tpu_custom_call.1} parent=1 // pred_check
      _
    $region55: #{tpu_custom_call.1} parent=1 // pred_check_branch
      %584 = sbr.rel (0) target = $region57
    $region56: #{tpu_custom_call.1} parent=1 // pred_region
      %s586 = ssub.s32 32, 32
      %587 = vsyncadd [#allocation3], %s586
      %s589 = sshll.u32 [#allocation2], 4
      %s590 = int_to_ptr.vmem [resolvable:$true] %s589
      %592 = dma.vmem_to_hbm [thread:$0]  %s590, 32, %s13, [#allocation3]
    $region57: #{tpu_custom_call.1} parent=1 // pred_fallthru
      _
    // Predicated region
    $region58: #{tpu_custom_call.1} parent=1 // pred_check
      _
    $region59: #{tpu_custom_call.1} parent=1 // pred_check_branch
      %594 = sbr.rel (0) target = $region61
    $region60: #{tpu_custom_call.1} parent=1 // pred_region
      %595 = dma.done [#allocation3], 32
    $region61: #{tpu_custom_call.1} parent=1 // pred_fallthru
      _
    %596 = vsyncpa [#allocation3], 1

// kernel: tpu_custom_call.1
$region0: #{tpu_custom_call.1}
  #allocation0 [shape = 'u32[]', space=smem, size = 0x4, offset = 0x4, fixed_abs, tag = 'smem constant byte address 0x4 - core index']
  #allocation1 [shape = 'u32[144,128]{1,0:T(1,128)}', space=vmem, size = 0x12000, scoped, tag = 'internal scratch']
  %s0 = inlined_call_operand.vmem [shape: f32[16,32], index: 0, kind: input, shape index: {}]
  %s1 = inlined_call_operand.vmem [shape: bf16[32,8], index: 1, kind: input, shape index: {}]
  %s2 = inlined_call_operand.vmem [shape: bf16[8,32], index: 2, kind: input, shape index: {}]
  %s3 = inlined_call_operand.vmem [shape: bf16[32,64], index: 3, kind: input, shape index: {}]
  %s4 = inlined_call_operand.vmem [shape: f32[1,64], index: 4, kind: input, shape index: {}]
  %s5 = inlined_call_operand.vmem [shape: bf16[32,32], index: 5, kind: input, shape index: {}]
  %s6 = inlined_call_operand.vmem [shape: f32[1,32], index: 6, kind: input, shape index: {}]
  %s7 = inlined_call_operand.vmem [shape: f32[1,32], index: 7, kind: input, shape index: {}]
  %s8 = inlined_call_operand.vmem [shape: f32[1,32], index: 8, kind: input, shape index: {}]
  %s9 = inlined_call_operand.vmem [shape: bf16[32,128], index: 9, kind: input, shape index: {}]
  %s10 = inlined_call_operand.vmem [shape: f32[1,128], index: 10, kind: input, shape index: {}]
  %s11 = inlined_call_operand.vmem [shape: bf16[128,32], index: 11, kind: input, shape index: {}]
  %s12 = inlined_call_operand.vmem [shape: f32[1,32], index: 12, kind: input, shape index: {}]
  %s13 = inlined_call_operand.hbm [shape: f32[2,32], index: 13, kind: output, shape index: {}]
  %s14 = sld [smem:[#allocation0]]
  $region62: #{tpu_custom_call.1} parent=0
    _
  %s16 = ssub.s32 1, %s14
  %s17 = scalar_select 0, %s16, %s14
  $region1: #{tpu_custom_call.1} parent=0
    #allocation2 [shape = 'u8[1024]{0}', space=vmem, size = 0x400, scoped, tag = 'output window, operand 0, single buffered']
    #allocation3 [shape = 's32[1]{0}', space=sflag, size = 0x4, scoped, tag = 'scoped memory for tpu_custom_call.1']
    %18 = vsyncpa [#allocation3], 0
    // Predicated region
    $region2: #{tpu_custom_call.1} parent=1 // pred_check
      _
    $region3: #{tpu_custom_call.1} parent=1 // pred_check_branch
      %20 = sbr.rel (0) target = $region5
    $region4: #{tpu_custom_call.1} parent=1 // pred_region
      _
    $region5: #{tpu_custom_call.1} parent=1 // pred_fallthru
      _
    // Predicated region
    $region6: #{tpu_custom_call.1} parent=1 // pred_check
      _
    $region7: #{tpu_custom_call.1} parent=1 // pred_check_branch
      %22 = sbr.rel (0) target = $region9
    $region8: #{tpu_custom_call.1} parent=1 // pred_region
      _
    $region9: #{tpu_custom_call.1} parent=1 // pred_fallthru
      _
    // Predicated region
    $region10: #{tpu_custom_call.1} parent=1 // pred_check
      _
    $region11: #{tpu_custom_call.1} parent=1 // pred_check_branch
      %24 = sbr.rel (0) target = $region13
    $region12: #{tpu_custom_call.1} parent=1 // pred_region
      _
    $region13: #{tpu_custom_call.1} parent=1 // pred_fallthru
      _
    // Predicated region
    $region14: #{tpu_custom_call.1} parent=1 // pred_check
      _
    $region15: #{tpu_custom_call.1} parent=1 // pred_check_branch
      %26 = sbr.rel (0) target = $region17
    $region16: #{tpu_custom_call.1} parent=1 // pred_region
      _
    $region17: #{tpu_custom_call.1} parent=1 // pred_fallthru
      _
    // Predicated region
    $region18: #{tpu_custom_call.1} parent=1 // pred_check
      _
    $region19: #{tpu_custom_call.1} parent=1 // pred_check_branch
      %28 = sbr.rel (0) target = $region21
    $region20: #{tpu_custom_call.1} parent=1 // pred_region
      _
    $region21: #{tpu_custom_call.1} parent=1 // pred_fallthru
      _
    // Predicated region
    $region22: #{tpu_custom_call.1} parent=1 // pred_check
      _
    $region23: #{tpu_custom_call.1} parent=1 // pred_check_branch
      %30 = sbr.rel (0) target = $region25
    $region24: #{tpu_custom_call.1} parent=1 // pred_region
      _
    $region25: #{tpu_custom_call.1} parent=1 // pred_fallthru
      _
    // Predicated region
    $region26: #{tpu_custom_call.1} parent=1 // pred_check
      _
    $region27: #{tpu_custom_call.1} parent=1 // pred_check_branch
      %32 = sbr.rel (0) target = $region29
    $region28: #{tpu_custom_call.1} parent=1 // pred_region
      _
    $region29: #{tpu_custom_call.1} parent=1 // pred_fallthru
      _
    // Predicated region
    $region30: #{tpu_custom_call.1} parent=1 // pred_check
      _
    $region31: #{tpu_custom_call.1} parent=1 // pred_check_branch
      %34 = sbr.rel (0) target = $region33
    $region32: #{tpu_custom_call.1} parent=1 // pred_region
      _
    $region33: #{tpu_custom_call.1} parent=1 // pred_fallthru
      _
    // Predicated region
    $region34: #{tpu_custom_call.1} parent=1 // pred_check
      _
    $region35: #{tpu_custom_call.1} parent=1 // pred_check_branch
      %36 = sbr.rel (0) target = $region37
    $region36: #{tpu_custom_call.1} parent=1 // pred_region
      _
    $region37: #{tpu_custom_call.1} parent=1 // pred_fallthru
      _
    // Predicated region
    $region38: #{tpu_custom_call.1} parent=1 // pred_check
      _
    $region39: #{tpu_custom_call.1} parent=1 // pred_check_branch
      %38 = sbr.rel (0) target = $region41
    $region40: #{tpu_custom_call.1} parent=1 // pred_region
      _
    $region41: #{tpu_custom_call.1} parent=1 // pred_fallthru
      _
    // Predicated region
    $region42: #{tpu_custom_call.1} parent=1 // pred_check
      _
    $region43: #{tpu_custom_call.1} parent=1 // pred_check_branch
      %40 = sbr.rel (0) target = $region45
    $region44: #{tpu_custom_call.1} parent=1 // pred_region
      _
    $region45: #{tpu_custom_call.1} parent=1 // pred_fallthru
      _
    // Predicated region
    $region46: #{tpu_custom_call.1} parent=1 // pred_check
      _
    $region47: #{tpu_custom_call.1} parent=1 // pred_check_branch
      %42 = sbr.rel (0) target = $region49
    $region48: #{tpu_custom_call.1} parent=1 // pred_region
      _
    $region49: #{tpu_custom_call.1} parent=1 // pred_fallthru
      _
    // Predicated region
    $region50: #{tpu_custom_call.1} parent=1 // pred_check
      _
    $region51: #{tpu_custom_call.1} parent=1 // pred_check_branch
      %44 = sbr.rel (0) target = $region53
    $region52: #{tpu_custom_call.1} parent=1 // pred_region
      _
    $region53: #{tpu_custom_call.1} parent=1 // pred_fallthru
      _
    %v46 = vld [vmem:[%s0] sm:$0xff]
    %v47 = vld [vmem:[%s0 + $0x8] sm:$0xff]
    %v48 = vpack.c.bf16 %v47, %v46
    %v49 = vld [vmem:[%s3] sm:$0xf]
    %v50 = vld [vmem:[%s3 + $0x4] sm:$0xf]
    %v51 = vld [vmem:[%s3 + $0x8] sm:$0xf]
    %v52 = vld [vmem:[%s3 + $0xc] sm:$0xf]
    %v53 = vld [vmem:[%s4] sm:$0x1]
    %v55 = vlaneseq
    %v56 = vshrl.u32 %v55, 7
    %v57 = vsub.s32 0, %v56
    %v58 = vrot.slane %v53, %v57
    %v64 = vunpack.c.l.b16 %v49
    %v65 = vunpack.c.l.b16 %v50
    %v66 = vunpack.c.l.b16 %v51
    %v67 = vunpack.c.l.b16 %v52
    %v68 = vpack.c.b16 %v65, %v64
    %v69 = vpack.c.b16 %v67, %v66
    %vm72 = vcmask 261120
    %v74 = vsel %vm72, %v48, 0
    %76 = vmatprep.subr.bf16.mxu0 0
    %77 = vmatpush1.bf16.msra.mxu0 %v68
    %78 = vmatprep.subr.bf16.mxu0 0
    %79 = vmatpush1.bf16.msra.mxu0 %v69
    %80 = vmatprep.subr.bf16.mxu0 0
    %81 = vmatpush1.bf16.msra.mxu0 0
    %82 = vmatprep.subr.bf16.mxu0 0
    %83 = vmatpush1.bf16.msra.mxu0 0
    %84 = vmatprep.subr.bf16.mxu0 0
    %85 = vmatpush1.bf16.msra.mxu0 0
    %86 = vmatprep.subr.bf16.mxu0 0
    %87 = vmatpush1.bf16.msra.mxu0 0
    %88 = vmatprep.subr.bf16.mxu0 0
    %89 = vmatpush1.bf16.msra.mxu0 0
    %90 = vmatprep.subr.bf16.mxu0 0
    %91 = vmatpush1.bf16.msra.mxu0 0
    %92 = vmatprep.subr.bf16.mxu0 0
    %93 = vmatpush1.bf16.msra.mxu0 0
    %94 = vmatprep.subr.bf16.mxu0 0
    %95 = vmatpush1.bf16.msra.mxu0 0
    %96 = vmatprep.subr.bf16.mxu0 0
    %97 = vmatpush1.bf16.msra.mxu0 0
    %98 = vmatprep.subr.bf16.mxu0 0
    %99 = vmatpush1.bf16.msra.mxu0 0
    %100 = vmatprep.subr.bf16.mxu0 0
    %101 = vmatpush1.bf16.msra.mxu0 0
    %102 = vmatprep.subr.bf16.mxu0 0
    %103 = vmatpush1.bf16.msra.mxu0 0
    %104 = vmatprep.subr.bf16.mxu0 0
    %105 = vmatpush1.bf16.msra.mxu0 0
    %106 = vmatprep.subr.bf16.mxu0 0
    %107 = vmatpush1.bf16.msra.mxu0 0
    %108 = vmatprep.mubr.bf16.mxu0 0
    %109 = vmatmul.mubr.bf16.gmra.mrb[0].mxu0 %v74
    %v110 = vpop.f32.mrb[0].mxu0
    %v111 = vadd.f32 %v58, %v110
    %v112 = vpop.f32.mrb[0].mxu0
    %v113 = vpop.f32.mrb[0].mxu0
    %v114 = vadd.f32 %v58, %v113
    %v115 = vpop.f32.mrb[0].mxu0
    %116 = vdwg.mxu0
    %v117 = vpack.c.bf16 %v114, %v111
    %v118 = vld [vmem:[%s1] sm:$0xf]
    %v119 = vld [vmem:[%s1 + $0x4] sm:$0xf]
    %v120 = vld [vmem:[%s1 + $0x8] sm:$0xf]
    %v121 = vld [vmem:[%s1 + $0xc] sm:$0xf]
    %v126 = vunpack.c.l.b16 %v118
    %v127 = vunpack.c.l.b16 %v119
    %v128 = vunpack.c.l.b16 %v120
    %v129 = vunpack.c.l.b16 %v121
    %v130 = vpack.c.b16 %v127, %v126
    %v131 = vpack.c.b16 %v129, %v128
    %v135 = vsel %vm72, %v117, 0
    %137 = vmatprep.subr.bf16.mxu0 0
    %138 = vmatpush1.bf16.msra.mxu0 %v130
    %139 = vmatprep.subr.bf16.mxu0 0
    %140 = vmatpush1.bf16.msra.mxu0 %v131
    %141 = vmatprep.subr.bf16.mxu0 0
    %142 = vmatpush1.bf16.msra.mxu0 0
    %143 = vmatprep.subr.bf16.mxu0 0
    %144 = vmatpush1.bf16.msra.mxu0 0
    %145 = vmatprep.subr.bf16.mxu0 0
    %146 = vmatpush1.bf16.msra.mxu0 0
    %147 = vmatprep.subr.bf16.mxu0 0
    %148 = vmatpush1.bf16.msra.mxu0 0
    %149 = vmatprep.subr.bf16.mxu0 0
    %150 = vmatpush1.bf16.msra.mxu0 0
    %151 = vmatprep.subr.bf16.mxu0 0
    %152 = vmatpush1.bf16.msra.mxu0 0
    %153 = vmatprep.subr.bf16.mxu0 0
    %154 = vmatpush1.bf16.msra.mxu0 0
    %155 = vmatprep.subr.bf16.mxu0 0
    %156 = vmatpush1.bf16.msra.mxu0 0
    %157 = vmatprep.subr.bf16.mxu0 0
    %158 = vmatpush1.bf16.msra.mxu0 0
    %159 = vmatprep.subr.bf16.mxu0 0
    %160 = vmatpush1.bf16.msra.mxu0 0
    %161 = vmatprep.subr.bf16.mxu0 0
    %162 = vmatpush1.bf16.msra.mxu0 0
    %163 = vmatprep.subr.bf16.mxu0 0
    %164 = vmatpush1.bf16.msra.mxu0 0
    %165 = vmatprep.subr.bf16.mxu0 0
    %166 = vmatpush1.bf16.msra.mxu0 0
    %167 = vmatprep.subr.bf16.mxu0 0
    %168 = vmatpush1.bf16.msra.mxu0 0
    %169 = vmatprep.mubr.bf16.mxu0 0
    %170 = vmatmul.mubr.bf16.gmra.mrb[0].mxu0 %v135
    %v171 = vpop.f32.mrb[0].mxu0
    %v172 = vadd.f32 0.0, %v171
    %v173 = vpop.f32.mrb[0].mxu0
    %v174 = vpop.f32.mrb[0].mxu0
    %v175 = vadd.f32 0.0, %v174
    %v176 = vpop.f32.mrb[0].mxu0
    %177 = vdwg.mxu0
    %vm178 = vcmask 64512
    %v179 = vsel %vm178, %v172, -inf
    %v180 = vrot.slane %v179, 4
    %v181 = vmax.f32 %v179, %v180
    %v182 = vrot.slane %v181, 2
    %v183 = vmax.f32 %v181, %v182
    %v184 = vrot.slane %v183, 1
    %v185 = vmax.f32 %v183, %v184
    %v186 = vsel %vm178, %v175, -inf
    %v187 = vrot.slane %v186, 4
    %v188 = vmax.f32 %v186, %v187
    %v189 = vrot.slane %v188, 2
    %v190 = vmax.f32 %v188, %v189
    %v191 = vrot.slane %v190, 1
    %v192 = vmax.f32 %v190, %v191
    %v193 = vsub.f32 %v172, %v185
    %v194 = vsub.f32 %v175, %v192
    %v195 = vmul.f32 %v193, 1.442695
    %v196 = vpow.pop %v195
    %v197 = vmul.f32 %v194, 1.442695
    %v198 = vpow.pop %v197
    %v199 = vsel %vm178, %v196, 0.0
    %v200 = vrot.slane %v199, 4
    %v201 = vadd.f32 %v199, %v200
    %v202 = vrot.slane %v201, 2
    %v203 = vadd.f32 %v201, %v202
    %v204 = vrot.slane %v203, 1
    %v205 = vadd.f32 %v203, %v204
    %v206 = vsel %vm178, %v198, 0.0
    %v207 = vrot.slane %v206, 4
    %v208 = vadd.f32 %v206, %v207
    %v209 = vrot.slane %v208, 2
    %v210 = vadd.f32 %v208, %v209
    %v211 = vrot.slane %v210, 1
    %v212 = vadd.f32 %v210, %v211
    %v213 = vrcp.pop %v205
    %v214 = vmul.f32 %v196, %v213
    %v215 = vrcp.pop %v212
    %v216 = vmul.f32 %v198, %v215
    %v217 = vld [vmem:[%s2] sm:$0xf]
    %v218 = vpack.c.bf16 %v216, %v214
    %v220 = vsel %vm178, %v218, 0
    %vm222 = vcmask 1043456
    %v224 = vsel %vm222, %v217, 0
    %226 = vmatprep.subr.bf16.mxu0 0
    %227 = vmatpush1.bf16.msra.mxu0 %v224
    %228 = vmatprep.subr.bf16.mxu0 0
    %229 = vmatpush1.bf16.msra.mxu0 0
    %230 = vmatprep.subr.bf16.mxu0 0
    %231 = vmatpush1.bf16.msra.mxu0 0
    %232 = vmatprep.subr.bf16.mxu0 0
    %233 = vmatpush1.bf16.msra.mxu0 0
    %234 = vmatprep.subr.bf16.mxu0 0
    %235 = vmatpush1.bf16.msra.mxu0 0
    %236 = vmatprep.subr.bf16.mxu0 0
    %237 = vmatpush1.bf16.msra.mxu0 0
    %238 = vmatprep.subr.bf16.mxu0 0
    %239 = vmatpush1.bf16.msra.mxu0 0
    %240 = vmatprep.subr.bf16.mxu0 0
    %241 = vmatpush1.bf16.msra.mxu0 0
    %242 = vmatprep.subr.bf16.mxu0 0
    %243 = vmatpush1.bf16.msra.mxu0 0
    %244 = vmatprep.subr.bf16.mxu0 0
    %245 = vmatpush1.bf16.msra.mxu0 0
    %246 = vmatprep.subr.bf16.mxu0 0
    %247 = vmatpush1.bf16.msra.mxu0 0
    %248 = vmatprep.subr.bf16.mxu0 0
    %249 = vmatpush1.bf16.msra.mxu0 0
    %250 = vmatprep.subr.bf16.mxu0 0
    %251 = vmatpush1.bf16.msra.mxu0 0
    %252 = vmatprep.subr.bf16.mxu0 0
    %253 = vmatpush1.bf16.msra.mxu0 0
    %254 = vmatprep.subr.bf16.mxu0 0
    %255 = vmatpush1.bf16.msra.mxu0 0
    %256 = vmatprep.subr.bf16.mxu0 0
    %257 = vmatpush1.bf16.msra.mxu0 0
    %258 = vmatprep.mubr.bf16.mxu0 0
    %259 = vmatmul.mubr.bf16.gmra.mrb[0].mxu0 %v220
    %v260 = vpop.f32.mrb[0].mxu0
    %v261 = vadd.f32 0.0, %v260
    %v262 = vpop.f32.mrb[0].mxu0
    %v263 = vpop.f32.mrb[0].mxu0
    %v264 = vadd.f32 0.0, %v263
    %v265 = vpop.f32.mrb[0].mxu0
    %266 = vdwg.mxu0
    %269 = vrot.lane.b32.xlu0 %v111, 96
    %v270 = vpop.permute.xlu0 %269
    %271 = vrot.lane.b32.xlu0 %v114, 96
    %v272 = vpop.permute.xlu0 %271
    %v275 = vmul.f32 %v261, %v270
    %v276 = vmul.f32 %v264, %v272
    %v277 = vsel %vm72, %v275, 0.0
    %v278 = vrot.slane %v277, 4
    %v279 = vadd.f32 %v277, %v278
    %v280 = vrot.slane %v279, 2
    %v281 = vadd.f32 %v279, %v280
    %v282 = vrot.slane %v281, 1
    %v283 = vadd.f32 %v281, %v282
    %v284 = vsel %vm72, %v276, 0.0
    %v285 = vrot.slane %v284, 4
    %v286 = vadd.f32 %v284, %v285
    %v287 = vrot.slane %v286, 2
    %v288 = vadd.f32 %v286, %v287
    %v289 = vrot.slane %v288, 1
    %v290 = vadd.f32 %v288, %v289
    %v291 = vpack.c.bf16 %v283, %v283
    %v292 = vpack.c.bf16 %v290, %v290
    %v293 = vld [vmem:[%s5] sm:$0xf]
    %v294 = vld [vmem:[%s5 + $0x4] sm:$0xf]
    %v295 = vld [vmem:[%s5 + $0x8] sm:$0xf]
    %v296 = vld [vmem:[%s5 + $0xc] sm:$0xf]
    %v297 = vld [vmem:[%s6] sm:$0x1]
    %v299 = vlaneseq
    %v300 = vshrl.u32 %v299, 7
    %v301 = vsub.s32 0, %v300
    %v302 = vrot.slane %v297, %v301
    %v306 = vunpack.c.l.b16 %v291
    %v307 = vunpack.c.l.b16 %v292
    %vm308 = vcmask 1041409
    %v309 = vsel %vm308, %v307, %v306
    %v310 = vpack.c.b16 %v309, %v309
    %v315 = vunpack.c.l.b16 %v293
    %v316 = vunpack.c.l.b16 %v294
    %v317 = vunpack.c.l.b16 %v295
    %v318 = vunpack.c.l.b16 %v296
    %v319 = vpack.c.b16 %v316, %v315
    %v320 = vpack.c.b16 %v318, %v317
    %v324 = vsel %vm72, %v310, 0
    %326 = vmatprep.subr.bf16.mxu0 0
    %327 = vmatpush1.bf16.msra.mxu0 %v319
    %328 = vmatprep.subr.bf16.mxu0 0
    %329 = vmatpush1.bf16.msra.mxu0 %v320
    %330 = vmatprep.subr.bf16.mxu0 0
    %331 = vmatpush1.bf16.msra.mxu0 0
    %332 = vmatprep.subr.bf16.mxu0 0
    %333 = vmatpush1.bf16.msra.mxu0 0
    %334 = vmatprep.subr.bf16.mxu0 0
    %335 = vmatpush1.bf16.msra.mxu0 0
    %336 = vmatprep.subr.bf16.mxu0 0
    %337 = vmatpush1.bf16.msra.mxu0 0
    %338 = vmatprep.subr.bf16.mxu0 0
    %339 = vmatpush1.bf16.msra.mxu0 0
    %340 = vmatprep.subr.bf16.mxu0 0
    %341 = vmatpush1.bf16.msra.mxu0 0
    %342 = vmatprep.subr.bf16.mxu0 0
    %343 = vmatpush1.bf16.msra.mxu0 0
    %344 = vmatprep.subr.bf16.mxu0 0
    %345 = vmatpush1.bf16.msra.mxu0 0
    %346 = vmatprep.subr.bf16.mxu0 0
    %347 = vmatpush1.bf16.msra.mxu0 0
    %348 = vmatprep.subr.bf16.mxu0 0
    %349 = vmatpush1.bf16.msra.mxu0 0
    %350 = vmatprep.subr.bf16.mxu0 0
    %351 = vmatpush1.bf16.msra.mxu0 0
    %352 = vmatprep.subr.bf16.mxu0 0
    %353 = vmatpush1.bf16.msra.mxu0 0
    %354 = vmatprep.subr.bf16.mxu0 0
    %355 = vmatpush1.bf16.msra.mxu0 0
    %356 = vmatprep.subr.bf16.mxu0 0
    %357 = vmatpush1.bf16.msra.mxu0 0
    %358 = vmatprep.mubr.bf16.mxu0 0
    %359 = vmatmul.mubr.bf16.gmra.mrb[0].mxu0 %v324
    %v360 = vpop.f32.mrb[0].mxu0
    %v361 = vadd.f32 %v302, %v360
    %v362 = vpop.f32.mrb[0].mxu0
    %v363 = vpop.f32.mrb[0].mxu0
    %v364 = vpop.f32.mrb[0].mxu0
    %365 = vdwg.mxu0
    %vm366 = vcmask 254976
    %v367 = vsel %vm366, %v361, 0.0
    %368 = vadd.xlane.f32.xlu0 %v367
    %v369 = vpop.xlane.xlu0 %368
    %v370 = vrcp.pop 32.0
    %v371 = vmul.f32 %v369, %v370
    %v372 = vsub.f32 %v361, %v371
    %v373 = vmul.f32 %v372, %v372
    %v374 = vsel %vm366, %v373, 0.0
    %375 = vadd.xlane.f32.xlu0 %v374
    %v376 = vpop.xlane.xlu0 %375
    %v377 = vmul.f32 %v376, %v370
    %v378 = vadd.f32 %v377, 1e-05
    %v379 = vrsqrt.pop %v378
    %v380 = vmul.f32 %v372, %v379
    %v381 = vld [vmem:[%s7] sm:$0x1]
    %v383 = vlaneseq
    %v384 = vshrl.u32 %v383, 7
    %v385 = vsub.s32 0, %v384
    %v386 = vrot.slane %v381, %v385
    %v388 = vmul.f32 %v380, %v386
    %v389 = vld [vmem:[%s8] sm:$0x1]
    %v391 = vlaneseq
    %v392 = vshrl.u32 %v391, 7
    %v393 = vsub.s32 0, %v392
    %v394 = vrot.slane %v389, %v393
    %v396 = vadd.f32 %v388, %v394
    %v397 = vpack.c.bf16 %v396, %v396
    %v398 = vld [vmem:[%s9] sm:$0xf]
    %v399 = vld [vmem:[%s9 + $0x4] sm:$0xf]
    %v400 = vld [vmem:[%s9 + $0x8] sm:$0xf]
    %v401 = vld [vmem:[%s9 + $0xc] sm:$0xf]
    %v402 = vld [vmem:[%s10] sm:$0x1]
    %v404 = vlaneseq
    %v405 = vshrl.u32 %v404, 7
    %v406 = vsub.s32 0, %v405
    %v407 = vrot.slane %v402, %v406
    %v413 = vunpack.c.l.b16 %v398
    %v414 = vunpack.c.l.b16 %v399
    %v415 = vunpack.c.l.b16 %v400
    %v416 = vunpack.c.l.b16 %v401
    %v417 = vpack.c.b16 %v414, %v413
    %v418 = vpack.c.b16 %v416, %v415
    %v422 = vsel %vm72, %v397, 0
    %424 = vmatprep.subr.bf16.mxu0 0
    %425 = vmatpush1.bf16.msra.mxu0 %v417
    %426 = vmatprep.subr.bf16.mxu0 0
    %427 = vmatpush1.bf16.msra.mxu0 %v418
    %428 = vmatprep.subr.bf16.mxu0 0
    %429 = vmatpush1.bf16.msra.mxu0 0
    %430 = vmatprep.subr.bf16.mxu0 0
    %431 = vmatpush1.bf16.msra.mxu0 0
    %432 = vmatprep.subr.bf16.mxu0 0
    %433 = vmatpush1.bf16.msra.mxu0 0
    %434 = vmatprep.subr.bf16.mxu0 0
    %435 = vmatpush1.bf16.msra.mxu0 0
    %436 = vmatprep.subr.bf16.mxu0 0
    %437 = vmatpush1.bf16.msra.mxu0 0
    %438 = vmatprep.subr.bf16.mxu0 0
    %439 = vmatpush1.bf16.msra.mxu0 0
    %440 = vmatprep.subr.bf16.mxu0 0
    %441 = vmatpush1.bf16.msra.mxu0 0
    %442 = vmatprep.subr.bf16.mxu0 0
    %443 = vmatpush1.bf16.msra.mxu0 0
    %444 = vmatprep.subr.bf16.mxu0 0
    %445 = vmatpush1.bf16.msra.mxu0 0
    %446 = vmatprep.subr.bf16.mxu0 0
    %447 = vmatpush1.bf16.msra.mxu0 0
    %448 = vmatprep.subr.bf16.mxu0 0
    %449 = vmatpush1.bf16.msra.mxu0 0
    %450 = vmatprep.subr.bf16.mxu0 0
    %451 = vmatpush1.bf16.msra.mxu0 0
    %452 = vmatprep.subr.bf16.mxu0 0
    %453 = vmatpush1.bf16.msra.mxu0 0
    %454 = vmatprep.subr.bf16.mxu0 0
    %455 = vmatpush1.bf16.msra.mxu0 0
    %456 = vmatprep.mubr.bf16.mxu0 0
    %457 = vmatmul.mubr.bf16.gmra.mrb[0].mxu0 %v422
    %v458 = vpop.f32.mrb[0].mxu0
    %v459 = vadd.f32 %v407, %v458
    %v460 = vpop.f32.mrb[0].mxu0
    %v461 = vpop.f32.mrb[0].mxu0
    %v462 = vpop.f32.mrb[0].mxu0
    %463 = vdwg.mxu0
    %v464 = vmul.f32 %v459, 0.5
    %v465 = vmul.f32 %v459, 0.70710677
    %v466 = verf.f32.pop %v465
    %v467 = vadd.f32 %v466, 1.0
    %v468 = vmul.f32 %v464, %v467
    %v469 = vpack.c.bf16 %v468, %v468
    %v470 = vld [vmem:[%s11] sm:$0xf]
    %v471 = vld [vmem:[%s11 + $0x4] sm:$0xf]
    %v472 = vld [vmem:[%s11 + $0x8] sm:$0xf]
    %v473 = vld [vmem:[%s11 + $0xc] sm:$0xf]
    %v474 = vld [vmem:[%s11 + $0x10] sm:$0xf]
    %v475 = vld [vmem:[%s11 + $0x14] sm:$0xf]
    %v476 = vld [vmem:[%s11 + $0x18] sm:$0xf]
    %v477 = vld [vmem:[%s11 + $0x1c] sm:$0xf]
    %v478 = vld [vmem:[%s11 + $0x20] sm:$0xf]
    %v479 = vld [vmem:[%s11 + $0x24] sm:$0xf]
    %v480 = vld [vmem:[%s11 + $0x28] sm:$0xf]
    %v481 = vld [vmem:[%s11 + $0x2c] sm:$0xf]
    %v482 = vld [vmem:[%s11 + $0x30] sm:$0xf]
    %v483 = vld [vmem:[%s11 + $0x34] sm:$0xf]
    %v484 = vld [vmem:[%s11 + $0x38] sm:$0xf]
    %v485 = vld [vmem:[%s11 + $0x3c] sm:$0xf]
    %v486 = vld [vmem:[%s12] sm:$0x1]
    %v488 = vlaneseq
    %v489 = vshrl.u32 %v488, 7
    %v490 = vsub.s32 0, %v489
    %v491 = vrot.slane %v486, %v490
    %v509 = vunpack.c.l.b16 %v470
    %v510 = vunpack.c.l.b16 %v471
    %v511 = vunpack.c.l.b16 %v472
    %v512 = vunpack.c.l.b16 %v473
    %v513 = vunpack.c.l.b16 %v474
    %v514 = vunpack.c.l.b16 %v475
    %v515 = vunpack.c.l.b16 %v476
    %v516 = vunpack.c.l.b16 %v477
    %v517 = vunpack.c.l.b16 %v478
    %v518 = vunpack.c.l.b16 %v479
    %v519 = vunpack.c.l.b16 %v480
    %v520 = vunpack.c.l.b16 %v481
    %v521 = vunpack.c.l.b16 %v482
    %v522 = vunpack.c.l.b16 %v483
    %v523 = vunpack.c.l.b16 %v484
    %v524 = vunpack.c.l.b16 %v485
    %v525 = vpack.c.b16 %v510, %v509
    %v526 = vpack.c.b16 %v512, %v511
    %v527 = vpack.c.b16 %v514, %v513
    %v528 = vpack.c.b16 %v516, %v515
    %v529 = vpack.c.b16 %v518, %v517
    %v530 = vpack.c.b16 %v520, %v519
    %v531 = vpack.c.b16 %v522, %v521
    %v532 = vpack.c.b16 %v524, %v523
    %541 = vmatprep.subr.bf16.mxu0 0
    %542 = vmatpush1.bf16.msra.mxu0 %v525
    %543 = vmatprep.subr.bf16.mxu0 0
    %544 = vmatpush1.bf16.msra.mxu0 %v526
    %545 = vmatprep.subr.bf16.mxu0 0
    %546 = vmatpush1.bf16.msra.mxu0 %v527
    %547 = vmatprep.subr.bf16.mxu0 0
    %548 = vmatpush1.bf16.msra.mxu0 %v528
    %549 = vmatprep.subr.bf16.mxu0 0
    %550 = vmatpush1.bf16.msra.mxu0 %v529
    %551 = vmatprep.subr.bf16.mxu0 0
    %552 = vmatpush1.bf16.msra.mxu0 %v530
    %553 = vmatprep.subr.bf16.mxu0 0
    %554 = vmatpush1.bf16.msra.mxu0 %v531
    %555 = vmatprep.subr.bf16.mxu0 0
    %556 = vmatpush1.bf16.msra.mxu0 %v532
    %557 = vmatprep.subr.bf16.mxu0 0
    %558 = vmatpush1.bf16.msra.mxu0 0
    %559 = vmatprep.subr.bf16.mxu0 0
    %560 = vmatpush1.bf16.msra.mxu0 0
    %561 = vmatprep.subr.bf16.mxu0 0
    %562 = vmatpush1.bf16.msra.mxu0 0
    %563 = vmatprep.subr.bf16.mxu0 0
    %564 = vmatpush1.bf16.msra.mxu0 0
    %565 = vmatprep.subr.bf16.mxu0 0
    %566 = vmatpush1.bf16.msra.mxu0 0
    %567 = vmatprep.subr.bf16.mxu0 0
    %568 = vmatpush1.bf16.msra.mxu0 0
    %569 = vmatprep.subr.bf16.mxu0 0
    %570 = vmatpush1.bf16.msra.mxu0 0
    %571 = vmatprep.subr.bf16.mxu0 0
    %572 = vmatpush1.bf16.msra.mxu0 0
    %573 = vmatprep.mubr.bf16.mxu0 0
    %574 = vmatmul.mubr.bf16.gmra.mrb[0].mxu0 %v469
    %v575 = vpop.f32.mrb[0].mxu0
    %v576 = vadd.f32 %v491, %v575
    %v577 = vpop.f32.mrb[0].mxu0
    %v578 = vpop.f32.mrb[0].mxu0
    %v579 = vpop.f32.mrb[0].mxu0
    %580 = vdwg.mxu0
    %v581 = vadd.f32 %v361, %v576
    %582 = vst.msk [vmem:[#allocation2] sm:$0x3] %vm366, %v581
    // Predicated region
    $region54: #{tpu_custom_call.1} parent=1 // pred_check
      _
    $region55: #{tpu_custom_call.1} parent=1 // pred_check_branch
      %584 = sbr.rel (0) target = $region57
    $region56: #{tpu_custom_call.1} parent=1 // pred_region
      %s586 = ssub.s32 32, 32
      %587 = vsyncadd [#allocation3], %s586
      %s589 = sshll.u32 [#allocation2], 4
      %s590 = int_to_ptr.vmem [resolvable:$true] %s589
      %592 = dma.vmem_to_hbm [thread:$0]  %s590, 32, %s13, [#allocation3]
    $region57: #{tpu_custom_call.1} parent=1 // pred_fallthru
      _
    // Predicated region
    $region58: #{tpu_custom_call.1} parent=1 // pred_check
      _
    $region59: #{tpu_custom_call.1} parent=1 // pred_check_branch
      %594 = sbr.rel (0) target = $region61
    $region60: #{tpu_custom_call.1} parent=1 // pred_region
      %595 = dma.done [#allocation3], 32
    $region61: #{tpu_custom_call.1} parent=1 // pred_fallthru
      _
    %596 = vsyncpa [#allocation3], 1

</llo_original>
